<compile_context>
chip_gen: v6e
topology: v6e:2x2x1
jax: 0.10.0
libtpu: 0.0.40
codegen_flags: <defaults>
</compile_context>

<pallas_src>
import functools

import jax
import jax.numpy as jnp
from jax.experimental import pallas as pl
from jax.experimental.pallas import tpu as pltpu

KSIZE = 3
WINDOW = float(KSIZE * KSIZE)          # Partial_Conv.window_size = 9
LANES = 128                            # TPU lane width
MATMUL_DTYPE = jnp.bfloat16            # MXU-native matmul input dtype (f32 acc)


def _round_up(x, m):
    return (x + m - 1) // m * m


# ----------------------------------------------------------------------------
# Pallas kernel: one row tile of the partial conv
#   out = relu(((xm_rows @ W) + b) * (window/(msum+1e-8)) * clamp(msum,0,1))
# ----------------------------------------------------------------------------
def _partial_conv_kernel(xm_ref, msum_ref, w_ref, b_ref, out_ref, *, apply_relu):
    # xm_ref  : (tm, K)  bf16  im2col rows of (input * mask)
    # msum_ref: (tm, 1)  f32   mask_conv output (sum of mask over window & Cin)
    # w_ref   : (K, CP)  bf16  conv weight, Cout zero-padded to CP (128-mult)
    # b_ref   : (1, CP)  f32   conv bias, zero-padded
    # out_ref : (tm, CP) f32   lane-dense output tile
    acc = jnp.dot(xm_ref[...], w_ref[...], preferred_element_type=jnp.float32)
    acc = acc + b_ref[...]

    msum = msum_ref[...]                                   # (tm, 1) f32
    clamped = jnp.clip(msum, 0.0, 1.0)
    # division -> EUP approximate reciprocal (free slot alongside MXU/VPU work)
    ratio = (WINDOW * pl.reciprocal(msum + 1e-8, approx=True)) * clamped

    acc = acc * ratio
    if apply_relu:
        acc = jnp.maximum(acc, 0.0)                        # EncoderLayer act_i
    out_ref[...] = acc


# ----------------------------------------------------------------------------
# Wrapper helpers (plain JAX, cheap at these sizes; fused by XLA)
# ----------------------------------------------------------------------------
def _extract_patches(x_nhwc, stride):
    """3x3 patches, padding=1.  (N,H,W,C) -> ((N,Ho,Wo,9,C), Ho, Wo)."""
    N, H, W, C = x_nhwc.shape
    pad = KSIZE // 2
    xp = jnp.pad(x_nhwc, ((0, 0), (pad, pad), (pad, pad), (0, 0)))
    Ho = (H + 2 * pad - KSIZE) // stride + 1
    Wo = (W + 2 * pad - KSIZE) // stride + 1
    cols = []
    for kh in range(KSIZE):
        for kw in range(KSIZE):
            cols.append(xp[:, kh:kh + stride * (Ho - 1) + 1:stride,
                           kw:kw + stride * (Wo - 1) + 1:stride, :])
    return jnp.stack(cols, axis=3), Ho, Wo


def _window_sum(m_nhw, stride):
    """3x3 box sum, padding=1, single channel: (N,H,W) -> ((N,Ho,Wo), Ho, Wo)."""
    N, H, W = m_nhw.shape
    pad = KSIZE // 2
    mp = jnp.pad(m_nhw, ((0, 0), (pad, pad), (pad, pad)))
    Ho = (H + 2 * pad - KSIZE) // stride + 1
    Wo = (W + 2 * pad - KSIZE) // stride + 1
    s = jnp.zeros((N, Ho, Wo), jnp.float32)
    for kh in range(KSIZE):
        for kw in range(KSIZE):
            s = s + mp[:, kh:kh + stride * (Ho - 1) + 1:stride,
                       kw:kw + stride * (Wo - 1) + 1:stride]
    return s, Ho, Wo


def _pick_tm(M, max_tm=512):
    """Row tile: as large as the problem allows; keep >=2 grid steps when the
    problem is big enough so both v7x TensorCores get a parallel step."""
    m8 = _round_up(M, 16)          # 16: bf16 sublane packing friendly
    if m8 <= 128:
        return m8
    if m8 <= 2 * max_tm:
        return _round_up((m8 + 1) // 2, 16)
    return max_tm


# ----------------------------------------------------------------------------
# One Partial_Conv (+ optional fused ReLU), NHWC in / NHWC out
# ----------------------------------------------------------------------------
def partial_conv_relu(x_nhwc, mask_nhwc, weight_oihw, bias, *, stride, apply_relu):
    """mask_nhwc has either Cin channels, or 1 channel when all mask channels
    are known to be identical (true for every layer after the first, since the
    mask_conv makes all output-mask channels equal).

    Returns (out (N,Ho,Wo,Cout) f32, mask_clamped (N,Ho,Wo) f32)."""
    N, H, W, Cin = x_nhwc.shape
    Cm = mask_nhwc.shape[-1]
    Cout = weight_oihw.shape[0]

    # --- mask_conv(mask): all-ones (Cout,Cin,3,3) weight -> one map, same for
    #     every output channel.  channel-sum + 3x3 box sum of a single channel.
    if Cm == 1:
        mchan = mask_nhwc[..., 0] * float(Cin)
    else:
        mchan = jnp.sum(mask_nhwc, axis=-1)
    msum_map, Ho, Wo = _window_sum(mchan, stride)            # (N, Ho, Wo) f32

    # --- im2col of (input * mask) -> rows (M, K), K = 9*Cin, cast to bf16
    xm = x_nhwc * mask_nhwc                                  # broadcasts if Cm==1
    patches, Ho2, Wo2 = _extract_patches(xm, stride)         # (N,Ho,Wo,9,Cin)
    assert (Ho, Wo) == (Ho2, Wo2)
    M = N * Ho * Wo
    K = KSIZE * KSIZE * Cin
    xm_rows = patches.reshape(M, K).astype(MATMUL_DTYPE)
    msum_rows = msum_map.reshape(M, 1)

    # --- pad rows to the tile; pad Cout up to a lane-dense multiple of 128
    tm = _pick_tm(M)
    Mp = _round_up(M, tm)
    if Mp != M:
        xm_rows = jnp.pad(xm_rows, ((0, Mp - M), (0, 0)))
        msum_rows = jnp.pad(msum_rows, ((0, Mp - M), (0, 0)))
    CP = _round_up(Cout, LANES)

    # OIHW -> (kh, kw, Cin, Cout) -> (K, Cout) -> zero-pad to (K, CP)
    w2 = jnp.transpose(weight_oihw, (2, 3, 1, 0)).reshape(K, Cout)
    w2 = jnp.pad(w2, ((0, 0), (0, CP - Cout))).astype(MATMUL_DTYPE)
    b2 = jnp.pad(bias.reshape(1, Cout).astype(jnp.float32),
                 ((0, 0), (0, CP - Cout)))

    kernel = functools.partial(_partial_conv_kernel, apply_relu=apply_relu)
    out = pl.pallas_call(
        kernel,
        out_shape=jax.ShapeDtypeStruct((Mp, CP), jnp.float32),
        grid_spec=pltpu.PrefetchScalarGridSpec(
            num_scalar_prefetch=0,
            grid=(Mp // tm,),
            in_specs=[pl.BlockSpec((tm, K), lambda i: (i, 0)),
                      pl.BlockSpec((tm, 1), lambda i: (i, 0)),
                      pl.BlockSpec((K, CP), lambda i: (0, 0)),
                      pl.BlockSpec((1, CP), lambda i: (0, 0))],
            out_specs=pl.BlockSpec((tm, CP), lambda i: (i, 0)),
        ),
        compiler_params=pltpu.CompilerParams(
            dimension_semantics=("parallel",)),
    )(xm_rows, msum_rows, w2, b2)

    out = out[:M, :Cout].reshape(N, Ho, Wo, Cout)
    mask_clamped = jnp.clip(msum_map, 0.0, 1.0)              # any output channel
    return out, mask_clamped


# ----------------------------------------------------------------------------
# EncoderLayer.forward
# ----------------------------------------------------------------------------
def encoder_layer(inputs_nchw, masks_nchw, params):
    """Returns (conv_out_1, mask_out_1, conv_out_2, mask_out_2), all NCHW."""
    x = jnp.transpose(inputs_nchw, (0, 2, 3, 1))             # NHWC internally
    m = jnp.transpose(masks_nchw, (0, 2, 3, 1))

    c1, m1 = partial_conv_relu(x, m, params["w1"], params["b1"],
                               stride=1, apply_relu=True)
    # intermediates stay NHWC; mask is a single channel (all channels identical)
    c2, m2 = partial_conv_relu(c1, m1[..., None], params["w2"], params["b2"],
                               stride=2, apply_relu=True)

    c1_nchw = jnp.transpose(c1, (0, 3, 1, 2))
    c2_nchw = jnp.transpose(c2, (0, 3, 1, 2))
    m1_nchw = jnp.broadcast_to(m1[:, None, :, :], c1_nchw.shape)
    m2_nchw = jnp.broadcast_to(m2[:, None, :, :], c2_nchw.shape)
    return c1_nchw, m1_nchw, c2_nchw, m2_nchw


# ----------------------------------------------------------------------------
# Pure-JAX reference (same bf16 matmul-input quantization; f32 elsewhere)
# ----------------------------------------------------------------------------
def _ref_partial_conv(x, mask, weight, bias, *, stride, apply_relu):
    dn = ("NCHW", "OIHW", "NCHW")
    pad = ((1, 1), (1, 1))
    xm = (x * mask).astype(MATMUL_DTYPE)
    out = jax.lax.conv_general_dilated(xm, weight.astype(MATMUL_DTYPE),
                                       (stride, stride), pad,
                                       dimension_numbers=dn,
                                       preferred_element_type=jnp.float32)
    out = out + bias.reshape(1, -1, 1, 1)
    omask = jax.lax.conv_general_dilated(mask, jnp.ones_like(weight),
                                         (stride, stride), pad,
                                         dimension_numbers=dn)
    ratio = WINDOW / (omask + 1e-8)
    omask_c = jnp.clip(omask, 0.0, 1.0)
    out = out * (ratio * omask_c)
    if apply_relu:
        out = jnp.maximum(out, 0.0)
    return out, omask_c


def _ref_encoder_layer(inputs, masks, params):
    c1, m1 = _ref_partial_conv(inputs, masks, params["w1"], params["b1"],
                               stride=1, apply_relu=True)
    c2, m2 = _ref_partial_conv(c1, m1, params["w2"], params["b2"],
                               stride=2, apply_relu=True)
    return c1, m1, c2, m2


# ----------------------------------------------------------------------------
if __name__ == "__main__":
    key = jax.random.PRNGKey(0)
    k_x, k_m, k_w1, k_b1, k_w2, k_b2 = jax.random.split(key, 6)

    N, Cin, Cout, H, W = 2, 4, 8, 16, 16

    inputs = jax.random.normal(k_x, (N, Cin, H, W), jnp.float32)
    masks = jax.random.bernoulli(k_m, 0.7, (N, Cin, H, W)).astype(jnp.float32)

    # Conv2d weight shapes: (Cout, Cin, 3, 3)
    params = {
        "w1": 0.1 * jax.random.normal(k_w1, (Cout, Cin, KSIZE, KSIZE), jnp.float32),
        "b1": 0.1 * jax.random.normal(k_b1, (Cout,), jnp.float32),
        "w2": 0.1 * jax.random.normal(k_w2, (Cout, Cout, KSIZE, KSIZE), jnp.float32),
        "b2": 0.1 * jax.random.normal(k_b2, (Cout,), jnp.float32),
    }

    fwd = jax.jit(encoder_layer)
    c1, m1, c2, m2 = jax.block_until_ready(fwd(inputs, masks, params))

    assert c1.shape == (N, Cout, H, W) and m1.shape == (N, Cout, H, W)
    assert c2.shape == (N, Cout, H // 2, W // 2) and m2.shape == (N, Cout, H // 2, W // 2)

    r1, rm1, r2, rm2 = _ref_encoder_layer(inputs, masks, params)
    # Reference shares the bf16 matmul-input quantization, so the remaining
    # difference is accumulation order + the EUP approx reciprocal -> tight tol.
    for got, ref in ((c1, r1), (m1, rm1), (c2, r2), (m2, rm2)):
        assert bool(jnp.allclose(got, ref, atol=1e-2, rtol=1e-2)), "mismatch vs reference"

    print("KERNEL_OK")
</pallas_src>

<mosaic_0001>
module attributes {stable_mosaic.version = 11 : i64} {
  func.func @_partial_conv_kernel(%arg0: i32, %arg1: memref<256x36xbf16, #tpu.memory_space<vmem>>, %arg2: memref<256x1xf32, #tpu.memory_space<vmem>>, %arg3: memref<36x128xbf16, #tpu.memory_space<vmem>>, %arg4: memref<1x128xf32, #tpu.memory_space<vmem>>, %arg5: memref<256x128xf32, #tpu.memory_space<vmem>>) attributes {dimension_semantics = [#tpu.dimension_semantics<parallel>], iteration_bounds = array<i64: 2>, scalar_prefetch = 0 : i64, scratch_operands = 0 : i64, tpu.core_type = #tpu.core_type<tc>, window_params = [{transform_indices = @transform_0, window_bounds = array<i64: 256, 36>}, {transform_indices = @transform_1, window_bounds = array<i64: 256, 1>}, {pipeline_mode = #tpu.pipeline_mode<synchronous>, transform_indices = @transform_2, window_bounds = array<i64: 36, 128>}, {pipeline_mode = #tpu.pipeline_mode<synchronous>, transform_indices = @transform_3, window_bounds = array<i64: 1, 128>}, {transform_indices = @transform_4, window_bounds = array<i64: 256, 128>}]} {
    %c0 = arith.constant 0 : index
    %c0_0 = arith.constant 0 : index
    %0 = vector.load %arg1[%c0, %c0_0] : memref<256x36xbf16, #tpu.memory_space<vmem>>, vector<256x36xbf16>
    %c0_1 = arith.constant 0 : index
    %c0_2 = arith.constant 0 : index
    %1 = vector.load %arg3[%c0_1, %c0_2] : memref<36x128xbf16, #tpu.memory_space<vmem>>, vector<36x128xbf16>
    %cst = arith.constant dense<0.000000e+00> : vector<256x128xf32>
    %2 = tpu.matmul %0, %1, %cst {dimension_numbers = #tpu.dot_dimension_numbers<[1], [0], [0], [1], [0, 0, 1, 1], [], []>} : vector<256x36xbf16>, vector<36x128xbf16>, vector<256x128xf32> -> vector<256x128xf32>
    %c0_3 = arith.constant 0 : index
    %c0_4 = arith.constant 0 : index
    %3 = vector.load %arg4[%c0_3, %c0_4] : memref<1x128xf32, #tpu.memory_space<vmem>>, vector<1x128xf32>
    %4 = vector.broadcast %3 : vector<1x128xf32> to vector<256x128xf32>
    %5 = arith.addf %2, %4 : vector<256x128xf32>
    %c0_5 = arith.constant 0 : index
    %c0_6 = arith.constant 0 : index
    %6 = vector.load %arg2[%c0_5, %c0_6] : memref<256x1xf32, #tpu.memory_space<vmem>>, vector<256x1xf32>
    %cst_7 = arith.constant 0.000000e+00 : f32
    %cst_8 = arith.constant 1.000000e+00 : f32
    %7 = vector.broadcast %cst_7 : f32 to vector<256x1xf32>
    %8 = arith.maximumf %7, %6 : vector<256x1xf32>
    %9 = vector.broadcast %cst_8 : f32 to vector<256x1xf32>
    %10 = arith.minimumf %9, %8 : vector<256x1xf32>
    %cst_9 = arith.constant 9.99999993E-9 : f32
    %11 = vector.broadcast %cst_9 : f32 to vector<256x1xf32>
    %12 = arith.addf %6, %11 : vector<256x1xf32>
    %13 = tpu.reciprocal %12 {approx = true} : vector<256x1xf32> -> vector<256x1xf32>
    %cst_10 = arith.constant 9.000000e+00 : f32
    %14 = vector.broadcast %cst_10 : f32 to vector<256x1xf32>
    %15 = arith.mulf %14, %13 : vector<256x1xf32>
    %16 = arith.mulf %15, %10 : vector<256x1xf32>
    %17 = vector.broadcast %16 : vector<256x1xf32> to vector<256x128xf32>
    %18 = arith.mulf %5, %17 : vector<256x128xf32>
    %cst_11 = arith.constant 0.000000e+00 : f32
    %19 = vector.broadcast %cst_11 : f32 to vector<256x128xf32>
    %20 = arith.maximumf %18, %19 : vector<256x128xf32>
    %c0_12 = arith.constant 0 : index
    %c0_13 = arith.constant 0 : index
    %21 = vector.load %arg5[%c0_12, %c0_13] : memref<256x128xf32, #tpu.memory_space<vmem>>, vector<256x128xf32>
    tpu.vector_store %arg5[%c0_12, %c0_13], %20 {strides = array<i32>} : memref<256x128xf32, #tpu.memory_space<vmem>>, vector<256x128xf32>,
    return
  }
  func.func @transform_0(%arg0: i32) -> (i32, i32) {
    %c0_i32 = arith.constant 0 : i32
    %c0_i32_0 = arith.constant 0 : i32
    return %arg0, %c0_i32 : i32, i32
  }
  func.func @transform_1(%arg0: i32) -> (i32, i32) {
    %c0_i32 = arith.constant 0 : i32
    %c0_i32_0 = arith.constant 0 : i32
    return %arg0, %c0_i32 : i32, i32
  }
  func.func @transform_2(%arg0: i32) -> (i32, i32) {
    %c0_i32 = arith.constant 0 : i32
    %c0_i32_0 = arith.constant 0 : i32
    %c0_i32_1 = arith.constant 0 : i32
    return %c0_i32, %c0_i32_0 : i32, i32
  }
  func.func @transform_3(%arg0: i32) -> (i32, i32) {
    %c0_i32 = arith.constant 0 : i32
    %c0_i32_0 = arith.constant 0 : i32
    %c0_i32_1 = arith.constant 0 : i32
    return %c0_i32, %c0_i32_0 : i32, i32
  }
  func.func @transform_4(%arg0: i32) -> (i32, i32) {
    %c0_i32 = arith.constant 0 : i32
    %c0_i32_0 = arith.constant 0 : i32
    return %arg0, %c0_i32 : i32, i32
  }
}

module attributes {stable_mosaic.version = 11 : i64} {
  func.func @_partial_conv_kernel(%arg0: i32, %arg1: memref<128x72xbf16, #tpu.memory_space<vmem>>, %arg2: memref<128x1xf32, #tpu.memory_space<vmem>>, %arg3: memref<72x128xbf16, #tpu.memory_space<vmem>>, %arg4: memref<1x128xf32, #tpu.memory_space<vmem>>, %arg5: memref<128x128xf32, #tpu.memory_space<vmem>>) attributes {dimension_semantics = [#tpu.dimension_semantics<parallel>], iteration_bounds = array<i64: 1>, scalar_prefetch = 0 : i64, scratch_operands = 0 : i64, tpu.core_type = #tpu.core_type<tc>, window_params = [{transform_indices = @transform_0, window_bounds = array<i64: 128, 72>}, {transform_indices = @transform_1, window_bounds = array<i64: 128, 1>}, {pipeline_mode = #tpu.pipeline_mode<synchronous>, transform_indices = @transform_2, window_bounds = array<i64: 72, 128>}, {pipeline_mode = #tpu.pipeline_mode<synchronous>, transform_indices = @transform_3, window_bounds = array<i64: 1, 128>}, {transform_indices = @transform_4, window_bounds = array<i64: 128, 128>}]} {
    %c0 = arith.constant 0 : index
    %c0_0 = arith.constant 0 : index
    %0 = vector.load %arg1[%c0, %c0_0] : memref<128x72xbf16, #tpu.memory_space<vmem>>, vector<128x72xbf16>
    %c0_1 = arith.constant 0 : index
    %c0_2 = arith.constant 0 : index
    %1 = vector.load %arg3[%c0_1, %c0_2] : memref<72x128xbf16, #tpu.memory_space<vmem>>, vector<72x128xbf16>
    %cst = arith.constant dense<0.000000e+00> : vector<128x128xf32>
    %2 = tpu.matmul %0, %1, %cst {dimension_numbers = #tpu.dot_dimension_numbers<[1], [0], [0], [1], [0, 0, 1, 1], [], []>} : vector<128x72xbf16>, vector<72x128xbf16>, vector<128x128xf32> -> vector<128x128xf32>
    %c0_3 = arith.constant 0 : index
    %c0_4 = arith.constant 0 : index
    %3 = vector.load %arg4[%c0_3, %c0_4] : memref<1x128xf32, #tpu.memory_space<vmem>>, vector<1x128xf32>
    %4 = vector.broadcast %3 : vector<1x128xf32> to vector<128x128xf32>
    %5 = arith.addf %2, %4 : vector<128x128xf32>
    %c0_5 = arith.constant 0 : index
    %c0_6 = arith.constant 0 : index
    %6 = vector.load %arg2[%c0_5, %c0_6] : memref<128x1xf32, #tpu.memory_space<vmem>>, vector<128x1xf32>
    %cst_7 = arith.constant 0.000000e+00 : f32
    %cst_8 = arith.constant 1.000000e+00 : f32
    %7 = vector.broadcast %cst_7 : f32 to vector<128x1xf32>
    %8 = arith.maximumf %7, %6 : vector<128x1xf32>
    %9 = vector.broadcast %cst_8 : f32 to vector<128x1xf32>
    %10 = arith.minimumf %9, %8 : vector<128x1xf32>
    %cst_9 = arith.constant 9.99999993E-9 : f32
    %11 = vector.broadcast %cst_9 : f32 to vector<128x1xf32>
    %12 = arith.addf %6, %11 : vector<128x1xf32>
    %13 = tpu.reciprocal %12 {approx = true} : vector<128x1xf32> -> vector<128x1xf32>
    %cst_10 = arith.constant 9.000000e+00 : f32
    %14 = vector.broadcast %cst_10 : f32 to vector<128x1xf32>
    %15 = arith.mulf %14, %13 : vector<128x1xf32>
    %16 = arith.mulf %15, %10 : vector<128x1xf32>
    %17 = vector.broadcast %16 : vector<128x1xf32> to vector<128x128xf32>
    %18 = arith.mulf %5, %17 : vector<128x128xf32>
    %cst_11 = arith.constant 0.000000e+00 : f32
    %19 = vector.broadcast %cst_11 : f32 to vector<128x128xf32>
    %20 = arith.maximumf %18, %19 : vector<128x128xf32>
    %c0_12 = arith.constant 0 : index
    %c0_13 = arith.constant 0 : index
    %21 = vector.load %arg5[%c0_12, %c0_13] : memref<128x128xf32, #tpu.memory_space<vmem>>, vector<128x128xf32>
    tpu.vector_store %arg5[%c0_12, %c0_13], %20 {strides = array<i32>} : memref<128x128xf32, #tpu.memory_space<vmem>>, vector<128x128xf32>,
    return
  }
  func.func @transform_0(%arg0: i32) -> (i32, i32) {
    %c0_i32 = arith.constant 0 : i32
    %c0_i32_0 = arith.constant 0 : i32
    return %arg0, %c0_i32 : i32, i32
  }
  func.func @transform_1(%arg0: i32) -> (i32, i32) {
    %c0_i32 = arith.constant 0 : i32
    %c0_i32_0 = arith.constant 0 : i32
    return %arg0, %c0_i32 : i32, i32
  }
  func.func @transform_2(%arg0: i32) -> (i32, i32) {
    %c0_i32 = arith.constant 0 : i32
    %c0_i32_0 = arith.constant 0 : i32
    %c0_i32_1 = arith.constant 0 : i32
    return %c0_i32, %c0_i32_0 : i32, i32
  }
  func.func @transform_3(%arg0: i32) -> (i32, i32) {
    %c0_i32 = arith.constant 0 : i32
    %c0_i32_0 = arith.constant 0 : i32
    %c0_i32_1 = arith.constant 0 : i32
    return %c0_i32, %c0_i32_0 : i32, i32
  }
  func.func @transform_4(%arg0: i32) -> (i32, i32) {
    %c0_i32 = arith.constant 0 : i32
    %c0_i32_0 = arith.constant 0 : i32
    return %arg0, %c0_i32 : i32, i32
  }
}

</mosaic_0001>

<llo_original>
// kernel: encoder_layer.2
$region0: #{encoder_layer.2}
  #allocation0 [shape = 'u32[]', space=smem, size = 0x4, offset = 0x4, fixed_abs, tag = 'smem constant byte address 0x4 - core index']
  #allocation1 [shape = 'u32[144,128]{1,0:T(1,128)}', space=vmem, size = 0x12000, scoped, tag = 'internal scratch']
  %s0 = inlined_call_operand.vmem [shape: bf16[512,36], index: 0, kind: input, shape index: {}]
  %s1 = inlined_call_operand.vmem [shape: f32[512,1], index: 1, kind: input, shape index: {}]
  %s2 = inlined_call_operand.vmem [shape: bf16[36,128], index: 2, kind: input, shape index: {}]
  %s3 = inlined_call_operand.vmem [shape: f32[1,128], index: 3, kind: input, shape index: {}]
  %s4 = inlined_call_operand.vmem [shape: f32[512,128], index: 4, kind: output, shape index: {}]
  %s5 = sld [smem:[#allocation0]]
  $region49: #{encoder_layer.2} parent=0
    _
  %s7 = ssub.s32 1, %s5
  %s8 = scalar_select 0, %s7, %s5
  loop: start=0, step=1, limit=4
  $region2: #{encoder_layer.2} parent=0 // loop_pre_header
    _
  $region3: #{encoder_layer.2} parent=0 // loop_header
    %s10 = sphi 0, %s14
    %p11 = scmp.ge.s32.totalorder %s10, 4
    %s20 = sphi 0, %s22
    %s23 = sphi 0, %s20
    %s24 = sphi 0, %s23
    %s40 = sphi 0, %s24
    %s46 = sphi 0, %s48
    %s49 = sphi 0, %s46
    %s50 = sphi 0, %s49
    %s66 = sphi 0, %s50
    %s70 = sphi 0, %s70
    %s72 = sphi 0, %s70
    %s73 = sphi 0, %s72
    %s87 = sphi 0, %s73
    %s91 = sphi 0, %s91
    %s93 = sphi 0, %s91
    %s94 = sphi 0, %s93
    %s108 = sphi 0, %s94
    %s114 = sphi 0, %s116
    %s117 = sphi 0, %s114
    %s118 = sphi 0, %s117
    %s134 = sphi 0, %s118
  $region4: #{encoder_layer.2} parent=0 // loop_header_branch
    %13 = sbr.rel (%p11) target = $region8
  $region5: #{encoder_layer.2} parent=0 // loop_body
    %s15 = ssub.s32 %s10, 1
    %s16 = ssub.s32 %s10, 2
    %s17 = sadd.s32 %s10, 1
    %s18 = ssub.s32 %s10, %s17
    %p19 = scmp.eq.s32.totalorder %s18, 0
    %s21 = sadd.s32 %s20, 1
    %s22 = scalar_select %p19, %s20, %s21
    %p25 = pneg %p19
    %p26 = scmp.eq.s32.totalorder %s10, 1
    %p27 = por %p25, %p26
    %p28 = scmp.ne.s32.totalorder %s20, %s23
    %p29 = scmp.eq.s32.totalorder %s10, 0
    %p30 = por %p28, %p29
    %p31 = scmp.ne.s32.totalorder %s20, %s23
    %p32 = scmp.eq.s32.totalorder %s15, 1
    %p33 = por %p31, %p32
    %p34 = scmp.ne.s32.totalorder %s23, %s24
    %p35 = scmp.eq.s32.totalorder %s15, 0
    %p36 = por %p34, %p35
    %p37 = scmp.ne.s32.totalorder %s23, %s24
    %p38 = scmp.eq.s32.totalorder %s16, 1
    %p39 = por %p37, %p38
    %p41 = scmp.ne.s32.totalorder %s24, %s40
    %p42 = scmp.eq.s32.totalorder %s16, 0
    %p43 = por %p41, %p42
    %s44 = ssub.s32 %s10, %s17
    %p45 = scmp.eq.s32.totalorder %s44, 0
    %s47 = sadd.s32 %s46, 1
    %s48 = scalar_select %p45, %s46, %s47
    %p51 = pneg %p45
    %p52 = scmp.eq.s32.totalorder %s10, 1
    %p53 = por %p51, %p52
    %p54 = scmp.ne.s32.totalorder %s46, %s49
    %p55 = scmp.eq.s32.totalorder %s10, 0
    %p56 = por %p54, %p55
    %p57 = scmp.ne.s32.totalorder %s46, %s49
    %p58 = scmp.eq.s32.totalorder %s15, 1
    %p59 = por %p57, %p58
    %p60 = scmp.ne.s32.totalorder %s49, %s50
    %p61 = scmp.eq.s32.totalorder %s15, 0
    %p62 = por %p60, %p61
    %p63 = scmp.ne.s32.totalorder %s49, %s50
    %p64 = scmp.eq.s32.totalorder %s16, 1
    %p65 = por %p63, %p64
    %p67 = scmp.ne.s32.totalorder %s50, %s66
    %p68 = scmp.eq.s32.totalorder %s16, 0
    %p69 = por %p67, %p68
    %s71 = sadd.s32 %s70, 1
    %p74 = scmp.eq.s32.totalorder %s10, 1
    %p75 = scmp.ne.s32.totalorder %s70, %s72
    %p76 = scmp.eq.s32.totalorder %s10, 0
    %p77 = por %p75, %p76
    %p78 = scmp.ne.s32.totalorder %s70, %s72
    %p79 = scmp.eq.s32.totalorder %s15, 1
    %p80 = por %p78, %p79
    %p81 = scmp.ne.s32.totalorder %s72, %s73
    %p82 = scmp.eq.s32.totalorder %s15, 0
    %p83 = por %p81, %p82
    %p84 = scmp.ne.s32.totalorder %s72, %s73
    %p85 = scmp.eq.s32.totalorder %s16, 1
    %p86 = por %p84, %p85
    %p88 = scmp.ne.s32.totalorder %s73, %s87
    %p89 = scmp.eq.s32.totalorder %s16, 0
    %p90 = por %p88, %p89
    %s92 = sadd.s32 %s91, 1
    %p95 = scmp.eq.s32.totalorder %s10, 1
    %p96 = scmp.ne.s32.totalorder %s91, %s93
    %p97 = scmp.eq.s32.totalorder %s10, 0
    %p98 = por %p96, %p97
    %p99 = scmp.ne.s32.totalorder %s91, %s93
    %p100 = scmp.eq.s32.totalorder %s15, 1
    %p101 = por %p99, %p100
    %p102 = scmp.ne.s32.totalorder %s93, %s94
    %p103 = scmp.eq.s32.totalorder %s15, 0
    %p104 = por %p102, %p103
    %p105 = scmp.ne.s32.totalorder %s93, %s94
    %p106 = scmp.eq.s32.totalorder %s16, 1
    %p107 = por %p105, %p106
    %p109 = scmp.ne.s32.totalorder %s94, %s108
    %p110 = scmp.eq.s32.totalorder %s16, 0
    %p111 = por %p109, %p110
    %s112 = ssub.s32 %s10, %s17
    %p113 = scmp.eq.s32.totalorder %s112, 0
    %s115 = sadd.s32 %s114, 1
    %s116 = scalar_select %p113, %s114, %s115
    %p119 = pneg %p113
    %p120 = scmp.eq.s32.totalorder %s10, 1
    %p121 = por %p119, %p120
    %p122 = scmp.ne.s32.totalorder %s114, %s117
    %p123 = scmp.eq.s32.totalorder %s10, 0
    %p124 = por %p122, %p123
    %p125 = scmp.ne.s32.totalorder %s114, %s117
    %p126 = scmp.eq.s32.totalorder %s15, 1
    %p127 = por %p125, %p126
    %p128 = scmp.ne.s32.totalorder %s117, %s118
    %p129 = scmp.eq.s32.totalorder %s15, 0
    %p130 = por %p128, %p129
    %p131 = scmp.ne.s32.totalorder %s117, %s118
    %p132 = scmp.eq.s32.totalorder %s16, 1
    %p133 = por %p131, %p132
    %p135 = scmp.ne.s32.totalorder %s118, %s134
    %p136 = scmp.eq.s32.totalorder %s16, 0
    %p137 = por %p135, %p136
    %p138 = scmp.le.s32.totalorder 1, %s10
    %p139 = scmp.lt.s32.totalorder %s10, 3
    %p140 = pnand %p138, %p139
    %p141 = pneg %p140
    // Predicated region
    $region9: #{encoder_layer.2} parent=5 // pred_check
      _
    $region10: #{encoder_layer.2} parent=5 // pred_check_branch
      %143 = sbr.rel (%p140) target = $region12
    $region11: #{encoder_layer.2} parent=5 // pred_region
      %s144 = ssub.s32 %s10, 1
      // Predicated region
      $region13: #{encoder_layer.2} parent=11 // pred_check
        %p145 = pneg %p83
      $region14: #{encoder_layer.2} parent=11 // pred_check_branch
        %147 = sbr.rel (%p145) target = $region16
      $region15: #{encoder_layer.2} parent=11 // pred_region
        _
      $region16: #{encoder_layer.2} parent=11 // pred_fallthru
        _
      // Predicated region
      $region17: #{encoder_layer.2} parent=11 // pred_check
        %p148 = pneg %p104
      $region18: #{encoder_layer.2} parent=11 // pred_check_branch
        %150 = sbr.rel (%p148) target = $region20
      $region19: #{encoder_layer.2} parent=11 // pred_region
        _
      $region20: #{encoder_layer.2} parent=11 // pred_fallthru
        _
    $region12: #{encoder_layer.2} parent=5 // pred_fallthru
      _
    %p151 = scmp.lt.s32.totalorder %s10, 2
    // Predicated region
    $region21: #{encoder_layer.2} parent=5 // pred_check
      %p152 = pneg %p151
    $region22: #{encoder_layer.2} parent=5 // pred_check_branch
      %154 = sbr.rel (%p152) target = $region24
    $region23: #{encoder_layer.2} parent=5 // pred_region
      // Predicated region
      $region25: #{encoder_layer.2} parent=23 // pred_check
        %p155 = pneg %p30
      $region26: #{encoder_layer.2} parent=23 // pred_check_branch
        %157 = sbr.rel (%p155) target = $region28
      $region27: #{encoder_layer.2} parent=23 // pred_region
        %s158 = smul.u32 32, %s10
        %p159 = scmp.lt.s32.totalorder %s158, 63
        %s160 = scalar_select %p159, %s158, 63
        %s161 = smul.addr %s160, 4
        %s162 = scalar_lea.vmem %s0, %s161
        %s163 = smul.u32 32, %s10
      $region28: #{encoder_layer.2} parent=23 // pred_fallthru
        _
      // Predicated region
      $region29: #{encoder_layer.2} parent=23 // pred_check
        %p164 = pneg %p56
      $region30: #{encoder_layer.2} parent=23 // pred_check_branch
        %166 = sbr.rel (%p164) target = $region32
      $region31: #{encoder_layer.2} parent=23 // pred_region
        %s167 = smul.u32 32, %s10
        %p168 = scmp.lt.s32.totalorder %s167, 63
        %s169 = scalar_select %p168, %s167, 63
        %s170 = smul.addr %s169, 8
        %s171 = scalar_lea.vmem %s1, %s170
        %s172 = smul.u32 32, %s10
      $region32: #{encoder_layer.2} parent=23 // pred_fallthru
        _
    $region24: #{encoder_layer.2} parent=5 // pred_fallthru
      _
    %p173 = scmp.le.s32.totalorder 1, %s10
    %p174 = scmp.lt.s32.totalorder %s10, 3
    %p175 = pnand %p173, %p174
    %p176 = pneg %p175
    // Predicated region
    $region33: #{encoder_layer.2} parent=5 // pred_check
      _
    $region34: #{encoder_layer.2} parent=5 // pred_check_branch
      %178 = sbr.rel (%p175) target = $region36
    $region35: #{encoder_layer.2} parent=5 // pred_region
      %s179 = ssub.s32 %s10, 1
      %s180 = smul.u32 32, %s15
      %p181 = scmp.lt.s32.totalorder %s180, 63
      %s182 = scalar_select %p181, %s180, 63
      %s183 = smul.addr %s182, 4
      %s184 = scalar_lea.vmem %s0, %s183
      %p185 = pneg %p36
      %p186 = pneg %p33
      %s187 = smul.u32 32, %s15
      %p188 = scmp.lt.s32.totalorder %s187, 63
      %s189 = scalar_select %p188, %s187, 63
      %s190 = smul.addr %s189, 8
      %s191 = scalar_lea.vmem %s1, %s190
      %p192 = pneg %p62
      %p193 = pneg %p59
      %p194 = pneg %p83
      %p195 = pneg %p80
      %p196 = pneg %p104
      %p197 = pneg %p101
      %p198 = pneg %p130
      %p199 = pneg %p127
      %s200 = smul.u32 32, %s15
      %p201 = scmp.lt.s32.totalorder %s200, 63
      %s202 = scalar_select %p201, %s200, 63
      %s203 = smul.addr %s202, 8
      %s204 = scalar_lea.vmem %s4, %s203
      %s205 = smul.u32 32, %s15
      %p206 = scmp.lt.s32.totalorder %s205, 63
      %s207 = scalar_select %p206, %s205, 63
      %s208 = smul.addr %s207, 4
      %s209 = scalar_lea.vmem %s0, %s208
      %s210 = smul.u32 32, %s15
      %s211 = smul.u32 32, %s15
      %p212 = scmp.lt.s32.totalorder %s211, 63
      %s213 = scalar_select %p212, %s211, 63
      %s214 = smul.addr %s213, 8
      %s215 = scalar_lea.vmem %s1, %s214
      %s216 = smul.u32 32, %s15
      %s217 = smul.u32 32, %s15
      %p218 = scmp.lt.s32.totalorder %s217, 63
      %s219 = scalar_select %p218, %s217, 63
      %s220 = smul.addr %s219, 8
      %s221 = scalar_lea.vmem %s4, %s220
      %s222 = smul.u32 32, %s15
      %v224 = vld [vmem:[%s209] sm:$0xf]
      %v225 = vld [vmem:[%s209 + $0x4] sm:$0xf]
      %v226 = vld [vmem:[%s209 + $0x8] sm:$0xf]
      %v227 = vld [vmem:[%s209 + $0xc] sm:$0xf]
      %v228 = vld [vmem:[%s209 + $0x10] sm:$0xf]
      %v229 = vld [vmem:[%s209 + $0x14] sm:$0xf]
      %v230 = vld [vmem:[%s209 + $0x18] sm:$0xf]
      %v231 = vld [vmem:[%s209 + $0x1c] sm:$0xf]
      %v232 = vld [vmem:[%s209 + $0x20] sm:$0xf]
      %v233 = vld [vmem:[%s209 + $0x24] sm:$0xf]
      %v234 = vld [vmem:[%s209 + $0x28] sm:$0xf]
      %v235 = vld [vmem:[%s209 + $0x2c] sm:$0xf]
      %v236 = vld [vmem:[%s209 + $0x30] sm:$0xf]
      %v237 = vld [vmem:[%s209 + $0x34] sm:$0xf]
      %v238 = vld [vmem:[%s209 + $0x38] sm:$0xf]
      %v239 = vld [vmem:[%s209 + $0x3c] sm:$0xf]
      %v240 = vld [vmem:[%s209 + $0x40] sm:$0xf]
      %v241 = vld [vmem:[%s209 + $0x44] sm:$0xf]
      %v242 = vld [vmem:[%s209 + $0x48] sm:$0xf]
      %v243 = vld [vmem:[%s209 + $0x4c] sm:$0xf]
      %v244 = vld [vmem:[%s209 + $0x50] sm:$0xf]
      %v245 = vld [vmem:[%s209 + $0x54] sm:$0xf]
      %v246 = vld [vmem:[%s209 + $0x58] sm:$0xf]
      %v247 = vld [vmem:[%s209 + $0x5c] sm:$0xf]
      %v248 = vld [vmem:[%s209 + $0x60] sm:$0xf]
      %v249 = vld [vmem:[%s209 + $0x64] sm:$0xf]
      %v250 = vld [vmem:[%s209 + $0x68] sm:$0xf]
      %v251 = vld [vmem:[%s209 + $0x6c] sm:$0xf]
      %v252 = vld [vmem:[%s209 + $0x70] sm:$0xf]
      %v253 = vld [vmem:[%s209 + $0x74] sm:$0xf]
      %v254 = vld [vmem:[%s209 + $0x78] sm:$0xf]
      %v255 = vld [vmem:[%s209 + $0x7c] sm:$0xf]
      %v256 = vld [vmem:[%s2] sm:$0xf]
      %v257 = vld [vmem:[%s2 + $0x4] sm:$0xf]
      %v258 = vld [vmem:[%s2 + $0x8] sm:$0xf]
      %v259 = vld [vmem:[%s2 + $0xc] sm:$0xf]
      %v260 = vld [vmem:[%s2 + $0x10] sm:$0x3]
      %v261 = vld [vmem:[%s3] sm:$0x1]
      %v263 = vlaneseq
      %v264 = vshrl.u32 %v263, 7
      %v265 = vsub.s32 0, %v264
      %v266 = vrot.slane %v261, %v265
      %v300 = vunpack.c.l.b16 %v224
      %v301 = vunpack.c.l.b16 %v225
      %v302 = vunpack.c.l.b16 %v226
      %v303 = vunpack.c.l.b16 %v227
      %v304 = vunpack.c.l.b16 %v228
      %v305 = vunpack.c.l.b16 %v229
      %v306 = vunpack.c.l.b16 %v230
      %v307 = vunpack.c.l.b16 %v231
      %v308 = vunpack.c.l.b16 %v232
      %v309 = vunpack.c.l.b16 %v233
      %v310 = vunpack.c.l.b16 %v234
      %v311 = vunpack.c.l.b16 %v235
      %v312 = vunpack.c.l.b16 %v236
      %v313 = vunpack.c.l.b16 %v237
      %v314 = vunpack.c.l.b16 %v238
      %v315 = vunpack.c.l.b16 %v239
      %v316 = vunpack.c.l.b16 %v240
      %v317 = vunpack.c.l.b16 %v241
      %v318 = vunpack.c.l.b16 %v242
      %v319 = vunpack.c.l.b16 %v243
      %v320 = vunpack.c.l.b16 %v244
      %v321 = vunpack.c.l.b16 %v245
      %v322 = vunpack.c.l.b16 %v246
      %v323 = vunpack.c.l.b16 %v247
      %v324 = vunpack.c.l.b16 %v248
      %v325 = vunpack.c.l.b16 %v249
      %v326 = vunpack.c.l.b16 %v250
      %v327 = vunpack.c.l.b16 %v251
      %v328 = vunpack.c.l.b16 %v252
      %v329 = vunpack.c.l.b16 %v253
      %v330 = vunpack.c.l.b16 %v254
      %v331 = vunpack.c.l.b16 %v255
      %v332 = vpack.c.b16 %v301, %v300
      %v333 = vpack.c.b16 %v303, %v302
      %v334 = vpack.c.b16 %v305, %v304
      %v335 = vpack.c.b16 %v307, %v306
      %v336 = vpack.c.b16 %v309, %v308
      %v337 = vpack.c.b16 %v311, %v310
      %v338 = vpack.c.b16 %v313, %v312
      %v339 = vpack.c.b16 %v315, %v314
      %v340 = vpack.c.b16 %v317, %v316
      %v341 = vpack.c.b16 %v319, %v318
      %v342 = vpack.c.b16 %v321, %v320
      %v343 = vpack.c.b16 %v323, %v322
      %v344 = vpack.c.b16 %v325, %v324
      %v345 = vpack.c.b16 %v327, %v326
      %v346 = vpack.c.b16 %v329, %v328
      %v347 = vpack.c.b16 %v331, %v330
      %v353 = vunpack.c.l.b16 %v256
      %v354 = vunpack.c.l.b16 %v257
      %v355 = vunpack.c.l.b16 %v258
      %v356 = vunpack.c.l.b16 %v259
      %v357 = vunpack.c.l.b16 %v260
      %v358 = vpack.c.b16 %v354, %v353
      %v359 = vpack.c.b16 %v356, %v355
      %v360 = vpack.c.b16 %v357, %v357
      %vm363 = vcmask 293888
      %v365 = vsel %vm363, %v332, 0
      %v368 = vsel %vm363, %v333, 0
      %v371 = vsel %vm363, %v334, 0
      %v374 = vsel %vm363, %v335, 0
      %v377 = vsel %vm363, %v336, 0
      %v380 = vsel %vm363, %v337, 0
      %v383 = vsel %vm363, %v338, 0
      %v386 = vsel %vm363, %v339, 0
      %v389 = vsel %vm363, %v340, 0
      %v392 = vsel %vm363, %v341, 0
      %v395 = vsel %vm363, %v342, 0
      %v398 = vsel %vm363, %v343, 0
      %v401 = vsel %vm363, %v344, 0
      %v404 = vsel %vm363, %v345, 0
      %v407 = vsel %vm363, %v346, 0
      %v410 = vsel %vm363, %v347, 0
      %vm412 = vcmask 1041408
      %v414 = vsel %vm412, %v360, 0
      %416 = vmatprep.subr.bf16.mxu0 0
      %417 = vmatpush1.bf16.msra.mxu0 0
      %418 = vmatprep.subr.bf16.mxu0 0
      %419 = vmatpush1.bf16.msra.mxu0 0
      %420 = vmatprep.subr.bf16.mxu0 0
      %421 = vmatpush1.bf16.msra.mxu0 0
      %422 = vmatprep.subr.bf16.mxu0 0
      %423 = vmatpush1.bf16.msra.mxu0 0
      %424 = vmatprep.subr.bf16.mxu0 0
      %425 = vmatpush1.bf16.msra.mxu0 0
      %426 = vmatprep.subr.bf16.mxu0 0
      %427 = vmatpush1.bf16.msra.mxu0 %v414
      %428 = vmatprep.subr.bf16.mxu0 0
      %429 = vmatpush1.bf16.msra.mxu0 %v359
      %430 = vmatprep.subr.bf16.mxu0 0
      %431 = vmatpush1.bf16.msra.mxu0 %v358
      %432 = vmatprep.subr.bf16.mxu0 0
      %433 = vmatpush2.bf16.msra.mxu0 0
      %434 = vmatprep.subr.bf16.mxu0 0
      %435 = vmatpush2.bf16.msra.mxu0 0
      %436 = vmatprep.subr.bf16.mxu0 0
      %437 = vmatpush2.bf16.msra.mxu0 0
      %438 = vmatprep.subr.bf16.mxu0 0
      %439 = vmatpush2.bf16.msra.mxu0 0
      %440 = vmatprep.subr.bf16.mxu0 0
      %441 = vmatpush2.bf16.msra.mxu0 0
      %442 = vmatprep.subr.bf16.mxu0 0
      %443 = vmatpush2.bf16.msra.mxu0 0
      %444 = vmatprep.subr.bf16.mxu0 0
      %445 = vmatpush2.bf16.msra.mxu0 0
      %446 = vmatprep.subr.bf16.mxu0 0
      %447 = vmatpush2.bf16.msra.mxu0 0
      %448 = vmatprep.mubr.bf16.mxu0 0
      %449 = vmatmul.mubr.bf16.gmra.mxu0 %v365
      %v450 = vpop.f32.mrf.mxu0
      %v451 = vadd.f32 %v266, %v450
      %v452 = vpop.f32.mrf.mxu0
      %v453 = vpop.f32.mrf.mxu0
      %v454 = vadd.f32 %v266, %v453
      %v455 = vpop.f32.mrf.mxu0
      %456 = vmatprep.mubr.bf16.mxu0 0
      %457 = vmatmul.mubr.bf16.gmra.mxu0 %v368
      %v458 = vpop.f32.mrf.mxu0
      %v459 = vadd.f32 %v266, %v458
      %v460 = vpop.f32.mrf.mxu0
      %v461 = vpop.f32.mrf.mxu0
      %v462 = vadd.f32 %v266, %v461
      %v463 = vpop.f32.mrf.mxu0
      %464 = vmatprep.mubr.bf16.mxu0 0
      %465 = vmatmul.mubr.bf16.gmra.mxu0 %v371
      %v466 = vpop.f32.mrf.mxu0
      %v467 = vadd.f32 %v266, %v466
      %v468 = vpop.f32.mrf.mxu0
      %v469 = vpop.f32.mrf.mxu0
      %v470 = vadd.f32 %v266, %v469
      %v471 = vpop.f32.mrf.mxu0
      %472 = vmatprep.mubr.bf16.mxu0 0
      %473 = vmatmul.mubr.bf16.gmra.mxu0 %v374
      %v474 = vpop.f32.mrf.mxu0
      %v475 = vadd.f32 %v266, %v474
      %v476 = vpop.f32.mrf.mxu0
      %v477 = vpop.f32.mrf.mxu0
      %v478 = vadd.f32 %v266, %v477
      %v479 = vpop.f32.mrf.mxu0
      %480 = vmatprep.mubr.bf16.mxu0 0
      %481 = vmatmul.mubr.bf16.gmra.mxu0 %v377
      %v482 = vpop.f32.mrf.mxu0
      %v483 = vadd.f32 %v266, %v482
      %v484 = vpop.f32.mrf.mxu0
      %v485 = vpop.f32.mrf.mxu0
      %v486 = vadd.f32 %v266, %v485
      %v487 = vpop.f32.mrf.mxu0
      %488 = vmatprep.mubr.bf16.mxu0 0
      %489 = vmatmul.mubr.bf16.gmra.mxu0 %v380
      %v490 = vpop.f32.mrf.mxu0
      %v491 = vadd.f32 %v266, %v490
      %v492 = vpop.f32.mrf.mxu0
      %v493 = vpop.f32.mrf.mxu0
      %v494 = vadd.f32 %v266, %v493
      %v495 = vpop.f32.mrf.mxu0
      %496 = vmatprep.mubr.bf16.mxu0 0
      %497 = vmatmul.mubr.bf16.gmra.mxu0 %v383
      %v498 = vpop.f32.mrf.mxu0
      %v499 = vadd.f32 %v266, %v498
      %v500 = vpop.f32.mrf.mxu0
      %v501 = vpop.f32.mrf.mxu0
      %v502 = vadd.f32 %v266, %v501
      %v503 = vpop.f32.mrf.mxu0
      %504 = vmatprep.mubr.bf16.mxu0 0
      %505 = vmatmul.mubr.bf16.gmra.mxu0 %v386
      %v506 = vpop.f32.mrf.mxu0
      %v507 = vadd.f32 %v266, %v506
      %v508 = vpop.f32.mrf.mxu0
      %v509 = vpop.f32.mrf.mxu0
      %v510 = vadd.f32 %v266, %v509
      %v511 = vpop.f32.mrf.mxu0
      %512 = vmatprep.mubr.bf16.mxu0 0
      %513 = vmatmul.mubr.bf16.gmra.mxu0 %v389
      %v514 = vpop.f32.mrf.mxu0
      %v515 = vadd.f32 %v266, %v514
      %v516 = vpop.f32.mrf.mxu0
      %v517 = vpop.f32.mrf.mxu0
      %v518 = vadd.f32 %v266, %v517
      %v519 = vpop.f32.mrf.mxu0
      %520 = vmatprep.mubr.bf16.mxu0 0
      %521 = vmatmul.mubr.bf16.gmra.mxu0 %v392
      %v522 = vpop.f32.mrf.mxu0
      %v523 = vadd.f32 %v266, %v522
      %v524 = vpop.f32.mrf.mxu0
      %v525 = vpop.f32.mrf.mxu0
      %v526 = vadd.f32 %v266, %v525
      %v527 = vpop.f32.mrf.mxu0
      %528 = vmatprep.mubr.bf16.mxu0 0
      %529 = vmatmul.mubr.bf16.gmra.mxu0 %v395
      %v530 = vpop.f32.mrf.mxu0
      %v531 = vadd.f32 %v266, %v530
      %v532 = vpop.f32.mrf.mxu0
      %v533 = vpop.f32.mrf.mxu0
      %v534 = vadd.f32 %v266, %v533
      %v535 = vpop.f32.mrf.mxu0
      %536 = vmatprep.mubr.bf16.mxu0 0
      %537 = vmatmul.mubr.bf16.gmra.mxu0 %v398
      %v538 = vpop.f32.mrf.mxu0
      %v539 = vadd.f32 %v266, %v538
      %v540 = vpop.f32.mrf.mxu0
      %v541 = vpop.f32.mrf.mxu0
      %v542 = vadd.f32 %v266, %v541
      %v543 = vpop.f32.mrf.mxu0
      %544 = vmatprep.mubr.bf16.mxu0 0
      %545 = vmatmul.mubr.bf16.gmra.mxu0 %v401
      %v546 = vpop.f32.mrf.mxu0
      %v547 = vadd.f32 %v266, %v546
      %v548 = vpop.f32.mrf.mxu0
      %v549 = vpop.f32.mrf.mxu0
      %v550 = vadd.f32 %v266, %v549
      %v551 = vpop.f32.mrf.mxu0
      %552 = vmatprep.mubr.bf16.mxu0 0
      %553 = vmatmul.mubr.bf16.gmra.mxu0 %v404
      %v554 = vpop.f32.mrf.mxu0
      %v555 = vadd.f32 %v266, %v554
      %v556 = vpop.f32.mrf.mxu0
      %v557 = vpop.f32.mrf.mxu0
      %v558 = vadd.f32 %v266, %v557
      %v559 = vpop.f32.mrf.mxu0
      %560 = vmatprep.mubr.bf16.mxu0 0
      %561 = vmatmul.mubr.bf16.gmra.mxu0 %v407
      %v562 = vpop.f32.mrf.mxu0
      %v563 = vadd.f32 %v266, %v562
      %v564 = vpop.f32.mrf.mxu0
      %v565 = vpop.f32.mrf.mxu0
      %v566 = vadd.f32 %v266, %v565
      %v567 = vpop.f32.mrf.mxu0
      %568 = vmatprep.mubr.bf16.mxu0 0
      %569 = vmatmul.mubr.bf16.gmra.mxu0 %v410
      %v570 = vpop.f32.mrf.mxu0
      %v571 = vadd.f32 %v266, %v570
      %v572 = vpop.f32.mrf.mxu0
      %v573 = vpop.f32.mrf.mxu0
      %v574 = vadd.f32 %v266, %v573
      %v575 = vpop.f32.mrf.mxu0
      %576 = vdwg.mxu0
      %v577 = vld [vmem:[%s215] sm:$0xff]
      %v578 = vld [vmem:[%s215 + $0x8] sm:$0xff]
      %v579 = vld [vmem:[%s215 + $0x10] sm:$0xff]
      %v580 = vld [vmem:[%s215 + $0x18] sm:$0xff]
      %v581 = vld [vmem:[%s215 + $0x20] sm:$0xff]
      %v582 = vld [vmem:[%s215 + $0x28] sm:$0xff]
      %v583 = vld [vmem:[%s215 + $0x30] sm:$0xff]
      %v584 = vld [vmem:[%s215 + $0x38] sm:$0xff]
      %v585 = vld [vmem:[%s215 + $0x40] sm:$0xff]
      %v586 = vld [vmem:[%s215 + $0x48] sm:$0xff]
      %v587 = vld [vmem:[%s215 + $0x50] sm:$0xff]
      %v588 = vld [vmem:[%s215 + $0x58] sm:$0xff]
      %v589 = vld [vmem:[%s215 + $0x60] sm:$0xff]
      %v590 = vld [vmem:[%s215 + $0x68] sm:$0xff]
      %v591 = vld [vmem:[%s215 + $0x70] sm:$0xff]
      %v592 = vld [vmem:[%s215 + $0x78] sm:$0xff]
      %v593 = vld [vmem:[%s215 + $0x80] sm:$0xff]
      %v594 = vld [vmem:[%s215 + $0x88] sm:$0xff]
      %v595 = vld [vmem:[%s215 + $0x90] sm:$0xff]
      %v596 = vld [vmem:[%s215 + $0x98] sm:$0xff]
      %v597 = vld [vmem:[%s215 + $0xa0] sm:$0xff]
      %v598 = vld [vmem:[%s215 + $0xa8] sm:$0xff]
      %v599 = vld [vmem:[%s215 + $0xb0] sm:$0xff]
      %v600 = vld [vmem:[%s215 + $0xb8] sm:$0xff]
      %v601 = vld [vmem:[%s215 + $0xc0] sm:$0xff]
      %v602 = vld [vmem:[%s215 + $0xc8] sm:$0xff]
      %v603 = vld [vmem:[%s215 + $0xd0] sm:$0xff]
      %v604 = vld [vmem:[%s215 + $0xd8] sm:$0xff]
      %v605 = vld [vmem:[%s215 + $0xe0] sm:$0xff]
      %v606 = vld [vmem:[%s215 + $0xe8] sm:$0xff]
      %v607 = vld [vmem:[%s215 + $0xf0] sm:$0xff]
      %v608 = vld [vmem:[%s215 + $0xf8] sm:$0xff]
      %v609 = vmax.f32 %v577, 0.0
      %v610 = vmax.f32 %v578, 0.0
      %v611 = vmax.f32 %v579, 0.0
      %v612 = vmax.f32 %v580, 0.0
      %v613 = vmax.f32 %v581, 0.0
      %v614 = vmax.f32 %v582, 0.0
      %v615 = vmax.f32 %v583, 0.0
      %v616 = vmax.f32 %v584, 0.0
      %v617 = vmax.f32 %v585, 0.0
      %v618 = vmax.f32 %v586, 0.0
      %v619 = vmax.f32 %v587, 0.0
      %v620 = vmax.f32 %v588, 0.0
      %v621 = vmax.f32 %v589, 0.0
      %v622 = vmax.f32 %v590, 0.0
      %v623 = vmax.f32 %v591, 0.0
      %v624 = vmax.f32 %v592, 0.0
      %v625 = vmax.f32 %v593, 0.0
      %v626 = vmax.f32 %v594, 0.0
      %v627 = vmax.f32 %v595, 0.0
      %v628 = vmax.f32 %v596, 0.0
      %v629 = vmax.f32 %v597, 0.0
      %v630 = vmax.f32 %v598, 0.0
      %v631 = vmax.f32 %v599, 0.0
      %v632 = vmax.f32 %v600, 0.0
      %v633 = vmax.f32 %v601, 0.0
      %v634 = vmax.f32 %v602, 0.0
      %v635 = vmax.f32 %v603, 0.0
      %v636 = vmax.f32 %v604, 0.0
      %v637 = vmax.f32 %v605, 0.0
      %v638 = vmax.f32 %v606, 0.0
      %v639 = vmax.f32 %v607, 0.0
      %v640 = vmax.f32 %v608, 0.0
      %v641 = vmin.f32 %v609, 1.0
      %v642 = vmin.f32 %v610, 1.0
      %v643 = vmin.f32 %v611, 1.0
      %v644 = vmin.f32 %v612, 1.0
      %v645 = vmin.f32 %v613, 1.0
      %v646 = vmin.f32 %v614, 1.0
      %v647 = vmin.f32 %v615, 1.0
      %v648 = vmin.f32 %v616, 1.0
      %v649 = vmin.f32 %v617, 1.0
      %v650 = vmin.f32 %v618, 1.0
      %v651 = vmin.f32 %v619, 1.0
      %v652 = vmin.f32 %v620, 1.0
      %v653 = vmin.f32 %v621, 1.0
      %v654 = vmin.f32 %v622, 1.0
      %v655 = vmin.f32 %v623, 1.0
      %v656 = vmin.f32 %v624, 1.0
      %v657 = vmin.f32 %v625, 1.0
      %v658 = vmin.f32 %v626, 1.0
      %v659 = vmin.f32 %v627, 1.0
      %v660 = vmin.f32 %v628, 1.0
      %v661 = vmin.f32 %v629, 1.0
      %v662 = vmin.f32 %v630, 1.0
      %v663 = vmin.f32 %v631, 1.0
      %v664 = vmin.f32 %v632, 1.0
      %v665 = vmin.f32 %v633, 1.0
      %v666 = vmin.f32 %v634, 1.0
      %v667 = vmin.f32 %v635, 1.0
      %v668 = vmin.f32 %v636, 1.0
      %v669 = vmin.f32 %v637, 1.0
      %v670 = vmin.f32 %v638, 1.0
      %v671 = vmin.f32 %v639, 1.0
      %v672 = vmin.f32 %v640, 1.0
      %v673 = vadd.f32 %v577, 1e-08
      %v674 = vadd.f32 %v578, 1e-08
      %v675 = vadd.f32 %v579, 1e-08
      %v676 = vadd.f32 %v580, 1e-08
      %v677 = vadd.f32 %v581, 1e-08
      %v678 = vadd.f32 %v582, 1e-08
      %v679 = vadd.f32 %v583, 1e-08
      %v680 = vadd.f32 %v584, 1e-08
      %v681 = vadd.f32 %v585, 1e-08
      %v682 = vadd.f32 %v586, 1e-08
      %v683 = vadd.f32 %v587, 1e-08
      %v684 = vadd.f32 %v588, 1e-08
      %v685 = vadd.f32 %v589, 1e-08
      %v686 = vadd.f32 %v590, 1e-08
      %v687 = vadd.f32 %v591, 1e-08
      %v688 = vadd.f32 %v592, 1e-08
      %v689 = vadd.f32 %v593, 1e-08
      %v690 = vadd.f32 %v594, 1e-08
      %v691 = vadd.f32 %v595, 1e-08
      %v692 = vadd.f32 %v596, 1e-08
      %v693 = vadd.f32 %v597, 1e-08
      %v694 = vadd.f32 %v598, 1e-08
      %v695 = vadd.f32 %v599, 1e-08
      %v696 = vadd.f32 %v600, 1e-08
      %v697 = vadd.f32 %v601, 1e-08
      %v698 = vadd.f32 %v602, 1e-08
      %v699 = vadd.f32 %v603, 1e-08
      %v700 = vadd.f32 %v604, 1e-08
      %v701 = vadd.f32 %v605, 1e-08
      %v702 = vadd.f32 %v606, 1e-08
      %v703 = vadd.f32 %v607, 1e-08
      %v704 = vadd.f32 %v608, 1e-08
      %v705 = vrcp.pop %v673
      %v706 = vrcp.pop %v674
      %v707 = vrcp.pop %v675
      %v708 = vrcp.pop %v676
      %v709 = vrcp.pop %v677
      %v710 = vrcp.pop %v678
      %v711 = vrcp.pop %v679
      %v712 = vrcp.pop %v680
      %v713 = vrcp.pop %v681
      %v714 = vrcp.pop %v682
      %v715 = vrcp.pop %v683
      %v716 = vrcp.pop %v684
      %v717 = vrcp.pop %v685
      %v718 = vrcp.pop %v686
      %v719 = vrcp.pop %v687
      %v720 = vrcp.pop %v688
      %v721 = vrcp.pop %v689
      %v722 = vrcp.pop %v690
      %v723 = vrcp.pop %v691
      %v724 = vrcp.pop %v692
      %v725 = vrcp.pop %v693
      %v726 = vrcp.pop %v694
      %v727 = vrcp.pop %v695
      %v728 = vrcp.pop %v696
      %v729 = vrcp.pop %v697
      %v730 = vrcp.pop %v698
      %v731 = vrcp.pop %v699
      %v732 = vrcp.pop %v700
      %v733 = vrcp.pop %v701
      %v734 = vrcp.pop %v702
      %v735 = vrcp.pop %v703
      %v736 = vrcp.pop %v704
      %v737 = vmul.f32 %v705, 9.0
      %v738 = vmul.f32 %v706, 9.0
      %v739 = vmul.f32 %v707, 9.0
      %v740 = vmul.f32 %v708, 9.0
      %v741 = vmul.f32 %v709, 9.0
      %v742 = vmul.f32 %v710, 9.0
      %v743 = vmul.f32 %v711, 9.0
      %v744 = vmul.f32 %v712, 9.0
      %v745 = vmul.f32 %v713, 9.0
      %v746 = vmul.f32 %v714, 9.0
      %v747 = vmul.f32 %v715, 9.0
      %v748 = vmul.f32 %v716, 9.0
      %v749 = vmul.f32 %v717, 9.0
      %v750 = vmul.f32 %v718, 9.0
      %v751 = vmul.f32 %v719, 9.0
      %v752 = vmul.f32 %v720, 9.0
      %v753 = vmul.f32 %v721, 9.0
      %v754 = vmul.f32 %v722, 9.0
      %v755 = vmul.f32 %v723, 9.0
      %v756 = vmul.f32 %v724, 9.0
      %v757 = vmul.f32 %v725, 9.0
      %v758 = vmul.f32 %v726, 9.0
      %v759 = vmul.f32 %v727, 9.0
      %v760 = vmul.f32 %v728, 9.0
      %v761 = vmul.f32 %v729, 9.0
      %v762 = vmul.f32 %v730, 9.0
      %v763 = vmul.f32 %v731, 9.0
      %v764 = vmul.f32 %v732, 9.0
      %v765 = vmul.f32 %v733, 9.0
      %v766 = vmul.f32 %v734, 9.0
      %v767 = vmul.f32 %v735, 9.0
      %v768 = vmul.f32 %v736, 9.0
      %v769 = vmul.f32 %v737, %v641
      %v770 = vmul.f32 %v738, %v642
      %v771 = vmul.f32 %v739, %v643
      %v772 = vmul.f32 %v740, %v644
      %v773 = vmul.f32 %v741, %v645
      %v774 = vmul.f32 %v742, %v646
      %v775 = vmul.f32 %v743, %v647
      %v776 = vmul.f32 %v744, %v648
      %v777 = vmul.f32 %v745, %v649
      %v778 = vmul.f32 %v746, %v650
      %v779 = vmul.f32 %v747, %v651
      %v780 = vmul.f32 %v748, %v652
      %v781 = vmul.f32 %v749, %v653
      %v782 = vmul.f32 %v750, %v654
      %v783 = vmul.f32 %v751, %v655
      %v784 = vmul.f32 %v752, %v656
      %v785 = vmul.f32 %v753, %v657
      %v786 = vmul.f32 %v754, %v658
      %v787 = vmul.f32 %v755, %v659
      %v788 = vmul.f32 %v756, %v660
      %v789 = vmul.f32 %v757, %v661
      %v790 = vmul.f32 %v758, %v662
      %v791 = vmul.f32 %v759, %v663
      %v792 = vmul.f32 %v760, %v664
      %v793 = vmul.f32 %v761, %v665
      %v794 = vmul.f32 %v762, %v666
      %v795 = vmul.f32 %v763, %v667
      %v796 = vmul.f32 %v764, %v668
      %v797 = vmul.f32 %v765, %v669
      %v798 = vmul.f32 %v766, %v670
      %v799 = vmul.f32 %v767, %v671
      %v800 = vmul.f32 %v768, %v672
      %802 = vset.pattern.permute.xlu0 0
      %803 = vperm.xlu0 %802, %v769
      %v804 = vpop.permute.xlu0 %803
      %807 = vset.pattern.permute.xlu0 0
      %808 = vperm.xlu0 %807, %v770
      %v809 = vpop.permute.xlu0 %808
      %812 = vset.pattern.permute.xlu0 0
      %813 = vperm.xlu0 %812, %v771
      %v814 = vpop.permute.xlu0 %813
      %817 = vset.pattern.permute.xlu0 0
      %818 = vperm.xlu0 %817, %v772
      %v819 = vpop.permute.xlu0 %818
      %822 = vset.pattern.permute.xlu0 0
      %823 = vperm.xlu0 %822, %v773
      %v824 = vpop.permute.xlu0 %823
      %827 = vset.pattern.permute.xlu0 0
      %828 = vperm.xlu0 %827, %v774
      %v829 = vpop.permute.xlu0 %828
      %832 = vset.pattern.permute.xlu0 0
      %833 = vperm.xlu0 %832, %v775
      %v834 = vpop.permute.xlu0 %833
      %837 = vset.pattern.permute.xlu0 0
      %838 = vperm.xlu0 %837, %v776
      %v839 = vpop.permute.xlu0 %838
      %842 = vset.pattern.permute.xlu0 0
      %843 = vperm.xlu0 %842, %v777
      %v844 = vpop.permute.xlu0 %843
      %847 = vset.pattern.permute.xlu0 0
      %848 = vperm.xlu0 %847, %v778
      %v849 = vpop.permute.xlu0 %848
      %852 = vset.pattern.permute.xlu0 0
      %853 = vperm.xlu0 %852, %v779
      %v854 = vpop.permute.xlu0 %853
      %857 = vset.pattern.permute.xlu0 0
      %858 = vperm.xlu0 %857, %v780
      %v859 = vpop.permute.xlu0 %858
      %862 = vset.pattern.permute.xlu0 0
      %863 = vperm.xlu0 %862, %v781
      %v864 = vpop.permute.xlu0 %863
      %867 = vset.pattern.permute.xlu0 0
      %868 = vperm.xlu0 %867, %v782
      %v869 = vpop.permute.xlu0 %868
      %872 = vset.pattern.permute.xlu0 0
      %873 = vperm.xlu0 %872, %v783
      %v874 = vpop.permute.xlu0 %873
      %877 = vset.pattern.permute.xlu0 0
      %878 = vperm.xlu0 %877, %v784
      %v879 = vpop.permute.xlu0 %878
      %882 = vset.pattern.permute.xlu0 0
      %883 = vperm.xlu0 %882, %v785
      %v884 = vpop.permute.xlu0 %883
      %887 = vset.pattern.permute.xlu0 0
      %888 = vperm.xlu0 %887, %v786
      %v889 = vpop.permute.xlu0 %888
      %892 = vset.pattern.permute.xlu0 0
      %893 = vperm.xlu0 %892, %v787
      %v894 = vpop.permute.xlu0 %893
      %897 = vset.pattern.permute.xlu0 0
      %898 = vperm.xlu0 %897, %v788
      %v899 = vpop.permute.xlu0 %898
      %902 = vset.pattern.permute.xlu0 0
      %903 = vperm.xlu0 %902, %v789
      %v904 = vpop.permute.xlu0 %903
      %907 = vset.pattern.permute.xlu0 0
      %908 = vperm.xlu0 %907, %v790
      %v909 = vpop.permute.xlu0 %908
      %912 = vset.pattern.permute.xlu0 0
      %913 = vperm.xlu0 %912, %v791
      %v914 = vpop.permute.xlu0 %913
      %917 = vset.pattern.permute.xlu0 0
      %918 = vperm.xlu0 %917, %v792
      %v919 = vpop.permute.xlu0 %918
      %922 = vset.pattern.permute.xlu0 0
      %923 = vperm.xlu0 %922, %v793
      %v924 = vpop.permute.xlu0 %923
      %927 = vset.pattern.permute.xlu0 0
      %928 = vperm.xlu0 %927, %v794
      %v929 = vpop.permute.xlu0 %928
      %932 = vset.pattern.permute.xlu0 0
      %933 = vperm.xlu0 %932, %v795
      %v934 = vpop.permute.xlu0 %933
      %937 = vset.pattern.permute.xlu0 0
      %938 = vperm.xlu0 %937, %v796
      %v939 = vpop.permute.xlu0 %938
      %942 = vset.pattern.permute.xlu0 0
      %943 = vperm.xlu0 %942, %v797
      %v944 = vpop.permute.xlu0 %943
      %947 = vset.pattern.permute.xlu0 0
      %948 = vperm.xlu0 %947, %v798
      %v949 = vpop.permute.xlu0 %948
      %952 = vset.pattern.permute.xlu0 0
      %953 = vperm.xlu0 %952, %v799
      %v954 = vpop.permute.xlu0 %953
      %957 = vset.pattern.permute.xlu0 0
      %958 = vperm.xlu0 %957, %v800
      %v959 = vpop.permute.xlu0 %958
      %v961 = vmul.f32 %v451, %v804
      %v962 = vmul.f32 %v454, %v809
      %v963 = vmul.f32 %v459, %v814
      %v964 = vmul.f32 %v462, %v819
      %v965 = vmul.f32 %v467, %v824
      %v966 = vmul.f32 %v470, %v829
      %v967 = vmul.f32 %v475, %v834
      %v968 = vmul.f32 %v478, %v839
      %v969 = vmul.f32 %v483, %v844
      %v970 = vmul.f32 %v486, %v849
      %v971 = vmul.f32 %v491, %v854
      %v972 = vmul.f32 %v494, %v859
      %v973 = vmul.f32 %v499, %v864
      %v974 = vmul.f32 %v502, %v869
      %v975 = vmul.f32 %v507, %v874
      %v976 = vmul.f32 %v510, %v879
      %v977 = vmul.f32 %v515, %v884
      %v978 = vmul.f32 %v518, %v889
      %v979 = vmul.f32 %v523, %v894
      %v980 = vmul.f32 %v526, %v899
      %v981 = vmul.f32 %v531, %v904
      %v982 = vmul.f32 %v534, %v909
      %v983 = vmul.f32 %v539, %v914
      %v984 = vmul.f32 %v542, %v919
      %v985 = vmul.f32 %v547, %v924
      %v986 = vmul.f32 %v550, %v929
      %v987 = vmul.f32 %v555, %v934
      %v988 = vmul.f32 %v558, %v939
      %v989 = vmul.f32 %v563, %v944
      %v990 = vmul.f32 %v566, %v949
      %v991 = vmul.f32 %v571, %v954
      %v992 = vmul.f32 %v574, %v959
      %v993 = vmax.f32 %v961, 0.0
      %v994 = vmax.f32 %v962, 0.0
      %v995 = vmax.f32 %v963, 0.0
      %v996 = vmax.f32 %v964, 0.0
      %v997 = vmax.f32 %v965, 0.0
      %v998 = vmax.f32 %v966, 0.0
      %v999 = vmax.f32 %v967, 0.0
      %v1000 = vmax.f32 %v968, 0.0
      %v1001 = vmax.f32 %v969, 0.0
      %v1002 = vmax.f32 %v970, 0.0
      %v1003 = vmax.f32 %v971, 0.0
      %v1004 = vmax.f32 %v972, 0.0
      %v1005 = vmax.f32 %v973, 0.0
      %v1006 = vmax.f32 %v974, 0.0
      %v1007 = vmax.f32 %v975, 0.0
      %v1008 = vmax.f32 %v976, 0.0
      %v1009 = vmax.f32 %v977, 0.0
      %v1010 = vmax.f32 %v978, 0.0
      %v1011 = vmax.f32 %v979, 0.0
      %v1012 = vmax.f32 %v980, 0.0
      %v1013 = vmax.f32 %v981, 0.0
      %v1014 = vmax.f32 %v982, 0.0
      %v1015 = vmax.f32 %v983, 0.0
      %v1016 = vmax.f32 %v984, 0.0
      %v1017 = vmax.f32 %v985, 0.0
      %v1018 = vmax.f32 %v986, 0.0
      %v1019 = vmax.f32 %v987, 0.0
      %v1020 = vmax.f32 %v988, 0.0
      %v1021 = vmax.f32 %v989, 0.0
      %v1022 = vmax.f32 %v990, 0.0
      %v1023 = vmax.f32 %v991, 0.0
      %v1024 = vmax.f32 %v992, 0.0
      %1025 = vst [vmem:[%s221] sm:$0xff] %v993
      %1026 = vst [vmem:[%s221 + $0x8] sm:$0xff] %v994
      %1027 = vst [vmem:[%s221 + $0x10] sm:$0xff] %v995
      %1028 = vst [vmem:[%s221 + $0x18] sm:$0xff] %v996
      %1029 = vst [vmem:[%s221 + $0x20] sm:$0xff] %v997
      %1030 = vst [vmem:[%s221 + $0x28] sm:$0xff] %v998
      %1031 = vst [vmem:[%s221 + $0x30] sm:$0xff] %v999
      %1032 = vst [vmem:[%s221 + $0x38] sm:$0xff] %v1000
      %1033 = vst [vmem:[%s221 + $0x40] sm:$0xff] %v1001
      %1034 = vst [vmem:[%s221 + $0x48] sm:$0xff] %v1002
      %1035 = vst [vmem:[%s221 + $0x50] sm:$0xff] %v1003
      %1036 = vst [vmem:[%s221 + $0x58] sm:$0xff] %v1004
      %1037 = vst [vmem:[%s221 + $0x60] sm:$0xff] %v1005
      %1038 = vst [vmem:[%s221 + $0x68] sm:$0xff] %v1006
      %1039 = vst [vmem:[%s221 + $0x70] sm:$0xff] %v1007
      %1040 = vst [vmem:[%s221 + $0x78] sm:$0xff] %v1008
      %1041 = vst [vmem:[%s221 + $0x80] sm:$0xff] %v1009
      %1042 = vst [vmem:[%s221 + $0x88] sm:$0xff] %v1010
      %1043 = vst [vmem:[%s221 + $0x90] sm:$0xff] %v1011
      %1044 = vst [vmem:[%s221 + $0x98] sm:$0xff] %v1012
      %1045 = vst [vmem:[%s221 + $0xa0] sm:$0xff] %v1013
      %1046 = vst [vmem:[%s221 + $0xa8] sm:$0xff] %v1014
      %1047 = vst [vmem:[%s221 + $0xb0] sm:$0xff] %v1015
      %1048 = vst [vmem:[%s221 + $0xb8] sm:$0xff] %v1016
      %1049 = vst [vmem:[%s221 + $0xc0] sm:$0xff] %v1017
      %1050 = vst [vmem:[%s221 + $0xc8] sm:$0xff] %v1018
      %1051 = vst [vmem:[%s221 + $0xd0] sm:$0xff] %v1019
      %1052 = vst [vmem:[%s221 + $0xd8] sm:$0xff] %v1020
      %1053 = vst [vmem:[%s221 + $0xe0] sm:$0xff] %v1021
      %1054 = vst [vmem:[%s221 + $0xe8] sm:$0xff] %v1022
      %1055 = vst [vmem:[%s221 + $0xf0] sm:$0xff] %v1023
      %1056 = vst [vmem:[%s221 + $0xf8] sm:$0xff] %v1024
      %s1057 = smul.u32 32, %s15
      %p1058 = scmp.lt.s32.totalorder %s1057, 63
      %s1059 = scalar_select %p1058, %s1057, 63
      %s1060 = smul.addr %s1059, 8
      %s1061 = scalar_lea.vmem %s4, %s1060
      // Predicated region
      $region37: #{encoder_layer.2} parent=35 // pred_check
        %p1062 = pneg %p127
      $region38: #{encoder_layer.2} parent=35 // pred_check_branch
        %1064 = sbr.rel (%p1062) target = $region40
      $region39: #{encoder_layer.2} parent=35 // pred_region
        %s1065 = smul.u32 32, %s15
      $region40: #{encoder_layer.2} parent=35 // pred_fallthru
        _
    $region36: #{encoder_layer.2} parent=5 // pred_fallthru
      _
    %p1066 = scmp.le.s32.totalorder 2, %s10
    // Predicated region
    $region41: #{encoder_layer.2} parent=5 // pred_check
      %p1067 = pneg %p1066
    $region42: #{encoder_layer.2} parent=5 // pred_check_branch
      %1069 = sbr.rel (%p1067) target = $region44
    $region43: #{encoder_layer.2} parent=5 // pred_region
      %s1070 = ssub.s32 %s10, 2
      // Predicated region
      $region45: #{encoder_layer.2} parent=43 // pred_check
        %p1071 = pneg %p133
      $region46: #{encoder_layer.2} parent=43 // pred_check_branch
        %1073 = sbr.rel (%p1071) target = $region48
      $region47: #{encoder_layer.2} parent=43 // pred_region
        %s1074 = smul.u32 32, %s16
        %p1075 = scmp.lt.s32.totalorder %s1074, 63
        %s1076 = scalar_select %p1075, %s1074, 63
        %s1077 = smul.addr %s1076, 8
        %s1078 = scalar_lea.vmem %s4, %s1077
      $region48: #{encoder_layer.2} parent=43 // pred_fallthru
        _
    $region44: #{encoder_layer.2} parent=5 // pred_fallthru
      _
  $region6: #{encoder_layer.2} parent=0 // loop_footer
    %s14 = sadd.s32 1, %s10
  $region7: #{encoder_layer.2} parent=0 // loop_footer_branch
    %9 = sbr.rel target = $region3
  $region8: #{encoder_layer.2} parent=0 // loop_exit
    _

// kernel: encoder_layer.3
$region0: #{encoder_layer.3}
  #allocation0 [shape = 'u32[]', space=smem, size = 0x4, offset = 0x4, fixed_abs, tag = 'smem constant byte address 0x4 - core index']
  #allocation1 [shape = 'u32[144,128]{1,0:T(1,128)}', space=vmem, size = 0x12000, scoped, tag = 'internal scratch']
  %s0 = inlined_call_operand.vmem [shape: bf16[128,72], index: 0, kind: input, shape index: {}]
  %s1 = inlined_call_operand.vmem [shape: f32[128,1], index: 1, kind: input, shape index: {}]
  %s2 = inlined_call_operand.vmem [shape: bf16[72,128], index: 2, kind: input, shape index: {}]
  %s3 = inlined_call_operand.vmem [shape: f32[1,128], index: 3, kind: input, shape index: {}]
  %s4 = inlined_call_operand.vmem [shape: f32[128,128], index: 4, kind: output, shape index: {}]
  %s5 = sld [smem:[#allocation0]]
  $region26: #{encoder_layer.3} parent=0
    _
  %s7 = ssub.s32 1, %s5
  %s8 = scalar_select 0, %s7, %s5
  // Predicated region
  $region2: #{encoder_layer.3} parent=0 // pred_check
    _
  $region3: #{encoder_layer.3} parent=0 // pred_check_branch
    %10 = sbr.rel (0) target = $region5
  $region4: #{encoder_layer.3} parent=0 // pred_region
    _
  $region5: #{encoder_layer.3} parent=0 // pred_fallthru
    _
  // Predicated region
  $region6: #{encoder_layer.3} parent=0 // pred_check
    _
  $region7: #{encoder_layer.3} parent=0 // pred_check_branch
    %12 = sbr.rel (0) target = $region9
  $region8: #{encoder_layer.3} parent=0 // pred_region
    _
  $region9: #{encoder_layer.3} parent=0 // pred_fallthru
    _
  // Predicated region
  $region10: #{encoder_layer.3} parent=0 // pred_check
    _
  $region11: #{encoder_layer.3} parent=0 // pred_check_branch
    %14 = sbr.rel (0) target = $region13
  $region12: #{encoder_layer.3} parent=0 // pred_region
    _
  $region13: #{encoder_layer.3} parent=0 // pred_fallthru
    _
  // Predicated region
  $region14: #{encoder_layer.3} parent=0 // pred_check
    _
  $region15: #{encoder_layer.3} parent=0 // pred_check_branch
    %16 = sbr.rel (0) target = $region17
  $region16: #{encoder_layer.3} parent=0 // pred_region
    _
  $region17: #{encoder_layer.3} parent=0 // pred_fallthru
    _
  %v18 = vld [vmem:[%s0] sm:$0xf]
  %v19 = vld [vmem:[%s0 + $0x4] sm:$0xf]
  %v20 = vld [vmem:[%s0 + $0x8] sm:$0xf]
  %v21 = vld [vmem:[%s0 + $0xc] sm:$0xf]
  %v22 = vld [vmem:[%s0 + $0x10] sm:$0xf]
  %v23 = vld [vmem:[%s0 + $0x14] sm:$0xf]
  %v24 = vld [vmem:[%s0 + $0x18] sm:$0xf]
  %v25 = vld [vmem:[%s0 + $0x1c] sm:$0xf]
  %v26 = vld [vmem:[%s0 + $0x20] sm:$0xf]
  %v27 = vld [vmem:[%s0 + $0x24] sm:$0xf]
  %v28 = vld [vmem:[%s0 + $0x28] sm:$0xf]
  %v29 = vld [vmem:[%s0 + $0x2c] sm:$0xf]
  %v30 = vld [vmem:[%s0 + $0x30] sm:$0xf]
  %v31 = vld [vmem:[%s0 + $0x34] sm:$0xf]
  %v32 = vld [vmem:[%s0 + $0x38] sm:$0xf]
  %v33 = vld [vmem:[%s0 + $0x3c] sm:$0xf]
  %v34 = vld [vmem:[%s2] sm:$0xf]
  %v35 = vld [vmem:[%s2 + $0x4] sm:$0xf]
  %v36 = vld [vmem:[%s2 + $0x8] sm:$0xf]
  %v37 = vld [vmem:[%s2 + $0xc] sm:$0xf]
  %v38 = vld [vmem:[%s2 + $0x10] sm:$0xf]
  %v39 = vld [vmem:[%s2 + $0x14] sm:$0xf]
  %v40 = vld [vmem:[%s2 + $0x18] sm:$0xf]
  %v41 = vld [vmem:[%s2 + $0x1c] sm:$0xf]
  %v42 = vld [vmem:[%s2 + $0x20] sm:$0xf]
  %v43 = vld [vmem:[%s3] sm:$0x1]
  %v45 = vlaneseq
  %v46 = vshrl.u32 %v45, 7
  %v47 = vsub.s32 0, %v46
  %v48 = vrot.slane %v43, %v47
  %v66 = vunpack.c.l.b16 %v18
  %v67 = vunpack.c.l.b16 %v19
  %v68 = vunpack.c.l.b16 %v20
  %v69 = vunpack.c.l.b16 %v21
  %v70 = vunpack.c.l.b16 %v22
  %v71 = vunpack.c.l.b16 %v23
  %v72 = vunpack.c.l.b16 %v24
  %v73 = vunpack.c.l.b16 %v25
  %v74 = vunpack.c.l.b16 %v26
  %v75 = vunpack.c.l.b16 %v27
  %v76 = vunpack.c.l.b16 %v28
  %v77 = vunpack.c.l.b16 %v29
  %v78 = vunpack.c.l.b16 %v30
  %v79 = vunpack.c.l.b16 %v31
  %v80 = vunpack.c.l.b16 %v32
  %v81 = vunpack.c.l.b16 %v33
  %v82 = vpack.c.b16 %v67, %v66
  %v83 = vpack.c.b16 %v69, %v68
  %v84 = vpack.c.b16 %v71, %v70
  %v85 = vpack.c.b16 %v73, %v72
  %v86 = vpack.c.b16 %v75, %v74
  %v87 = vpack.c.b16 %v77, %v76
  %v88 = vpack.c.b16 %v79, %v78
  %v89 = vpack.c.b16 %v81, %v80
  %v99 = vunpack.c.l.b16 %v34
  %v100 = vunpack.c.l.b16 %v35
  %v101 = vunpack.c.l.b16 %v36
  %v102 = vunpack.c.l.b16 %v37
  %v103 = vunpack.c.l.b16 %v38
  %v104 = vunpack.c.l.b16 %v39
  %v105 = vunpack.c.l.b16 %v40
  %v106 = vunpack.c.l.b16 %v41
  %v107 = vunpack.c.l.b16 %v42
  %v108 = vpack.c.b16 %v100, %v99
  %v109 = vpack.c.b16 %v102, %v101
  %v110 = vpack.c.b16 %v104, %v103
  %v111 = vpack.c.b16 %v106, %v105
  %v112 = vpack.c.b16 %v107, %v107
  %vm117 = vcmask 588800
  %v119 = vsel %vm117, %v82, 0
  %v122 = vsel %vm117, %v83, 0
  %v125 = vsel %vm117, %v84, 0
  %v128 = vsel %vm117, %v85, 0
  %v131 = vsel %vm117, %v86, 0
  %v134 = vsel %vm117, %v87, 0
  %v137 = vsel %vm117, %v88, 0
  %v140 = vsel %vm117, %v89, 0
  %vm142 = vcmask 1043456
  %v144 = vsel %vm142, %v112, 0
  %146 = vmatprep.subr.bf16.mxu0 0
  %147 = vmatpush1.bf16.msra.mxu0 0
  %148 = vmatprep.subr.bf16.mxu0 0
  %149 = vmatpush1.bf16.msra.mxu0 0
  %150 = vmatprep.subr.bf16.mxu0 0
  %151 = vmatpush1.bf16.msra.mxu0 0
  %152 = vmatprep.subr.bf16.mxu0 0
  %153 = vmatpush1.bf16.msra.mxu0 %v144
  %154 = vmatprep.subr.bf16.mxu0 0
  %155 = vmatpush1.bf16.msra.mxu0 %v111
  %156 = vmatprep.subr.bf16.mxu0 0
  %157 = vmatpush1.bf16.msra.mxu0 %v110
  %158 = vmatprep.subr.bf16.mxu0 0
  %159 = vmatpush1.bf16.msra.mxu0 %v109
  %160 = vmatprep.subr.bf16.mxu0 0
  %161 = vmatpush1.bf16.msra.mxu0 %v108
  %162 = vmatprep.subr.bf16.mxu0 0
  %163 = vmatpush2.bf16.msra.mxu0 0
  %164 = vmatprep.subr.bf16.mxu0 0
  %165 = vmatpush2.bf16.msra.mxu0 0
  %166 = vmatprep.subr.bf16.mxu0 0
  %167 = vmatpush2.bf16.msra.mxu0 0
  %168 = vmatprep.subr.bf16.mxu0 0
  %169 = vmatpush2.bf16.msra.mxu0 0
  %170 = vmatprep.subr.bf16.mxu0 0
  %171 = vmatpush2.bf16.msra.mxu0 0
  %172 = vmatprep.subr.bf16.mxu0 0
  %173 = vmatpush2.bf16.msra.mxu0 0
  %174 = vmatprep.subr.bf16.mxu0 0
  %175 = vmatpush2.bf16.msra.mxu0 0
  %176 = vmatprep.subr.bf16.mxu0 0
  %177 = vmatpush2.bf16.msra.mxu0 0
  %178 = vmatprep.mubr.bf16.mxu0 0
  %179 = vmatmul.mubr.bf16.gmra.mxu0 %v119
  %v180 = vpop.f32.mrf.mxu0
  %v181 = vadd.f32 %v48, %v180
  %v182 = vpop.f32.mrf.mxu0
  %v183 = vpop.f32.mrf.mxu0
  %v184 = vadd.f32 %v48, %v183
  %v185 = vpop.f32.mrf.mxu0
  %186 = vmatprep.mubr.bf16.mxu0 0
  %187 = vmatmul.mubr.bf16.gmra.mxu0 %v122
  %v188 = vpop.f32.mrf.mxu0
  %v189 = vadd.f32 %v48, %v188
  %v190 = vpop.f32.mrf.mxu0
  %v191 = vpop.f32.mrf.mxu0
  %v192 = vadd.f32 %v48, %v191
  %v193 = vpop.f32.mrf.mxu0
  %194 = vmatprep.mubr.bf16.mxu0 0
  %195 = vmatmul.mubr.bf16.gmra.mxu0 %v125
  %v196 = vpop.f32.mrf.mxu0
  %v197 = vadd.f32 %v48, %v196
  %v198 = vpop.f32.mrf.mxu0
  %v199 = vpop.f32.mrf.mxu0
  %v200 = vadd.f32 %v48, %v199
  %v201 = vpop.f32.mrf.mxu0
  %202 = vmatprep.mubr.bf16.mxu0 0
  %203 = vmatmul.mubr.bf16.gmra.mxu0 %v128
  %v204 = vpop.f32.mrf.mxu0
  %v205 = vadd.f32 %v48, %v204
  %v206 = vpop.f32.mrf.mxu0
  %v207 = vpop.f32.mrf.mxu0
  %v208 = vadd.f32 %v48, %v207
  %v209 = vpop.f32.mrf.mxu0
  %210 = vmatprep.mubr.bf16.mxu0 0
  %211 = vmatmul.mubr.bf16.gmra.mxu0 %v131
  %v212 = vpop.f32.mrf.mxu0
  %v213 = vadd.f32 %v48, %v212
  %v214 = vpop.f32.mrf.mxu0
  %v215 = vpop.f32.mrf.mxu0
  %v216 = vadd.f32 %v48, %v215
  %v217 = vpop.f32.mrf.mxu0
  %218 = vmatprep.mubr.bf16.mxu0 0
  %219 = vmatmul.mubr.bf16.gmra.mxu0 %v134
  %v220 = vpop.f32.mrf.mxu0
  %v221 = vadd.f32 %v48, %v220
  %v222 = vpop.f32.mrf.mxu0
  %v223 = vpop.f32.mrf.mxu0
  %v224 = vadd.f32 %v48, %v223
  %v225 = vpop.f32.mrf.mxu0
  %226 = vmatprep.mubr.bf16.mxu0 0
  %227 = vmatmul.mubr.bf16.gmra.mxu0 %v137
  %v228 = vpop.f32.mrf.mxu0
  %v229 = vadd.f32 %v48, %v228
  %v230 = vpop.f32.mrf.mxu0
  %v231 = vpop.f32.mrf.mxu0
  %v232 = vadd.f32 %v48, %v231
  %v233 = vpop.f32.mrf.mxu0
  %234 = vmatprep.mubr.bf16.mxu0 0
  %235 = vmatmul.mubr.bf16.gmra.mxu0 %v140
  %v236 = vpop.f32.mrf.mxu0
  %v237 = vadd.f32 %v48, %v236
  %v238 = vpop.f32.mrf.mxu0
  %v239 = vpop.f32.mrf.mxu0
  %v240 = vadd.f32 %v48, %v239
  %v241 = vpop.f32.mrf.mxu0
  %242 = vdwg.mxu0
  %v243 = vld [vmem:[%s1] sm:$0xff]
  %v244 = vld [vmem:[%s1 + $0x8] sm:$0xff]
  %v245 = vld [vmem:[%s1 + $0x10] sm:$0xff]
  %v246 = vld [vmem:[%s1 + $0x18] sm:$0xff]
  %v247 = vld [vmem:[%s1 + $0x20] sm:$0xff]
  %v248 = vld [vmem:[%s1 + $0x28] sm:$0xff]
  %v249 = vld [vmem:[%s1 + $0x30] sm:$0xff]
  %v250 = vld [vmem:[%s1 + $0x38] sm:$0xff]
  %v251 = vld [vmem:[%s1 + $0x40] sm:$0xff]
  %v252 = vld [vmem:[%s1 + $0x48] sm:$0xff]
  %v253 = vld [vmem:[%s1 + $0x50] sm:$0xff]
  %v254 = vld [vmem:[%s1 + $0x58] sm:$0xff]
  %v255 = vld [vmem:[%s1 + $0x60] sm:$0xff]
  %v256 = vld [vmem:[%s1 + $0x68] sm:$0xff]
  %v257 = vld [vmem:[%s1 + $0x70] sm:$0xff]
  %v258 = vld [vmem:[%s1 + $0x78] sm:$0xff]
  %v259 = vmax.f32 %v243, 0.0
  %v260 = vmax.f32 %v244, 0.0
  %v261 = vmax.f32 %v245, 0.0
  %v262 = vmax.f32 %v246, 0.0
  %v263 = vmax.f32 %v247, 0.0
  %v264 = vmax.f32 %v248, 0.0
  %v265 = vmax.f32 %v249, 0.0
  %v266 = vmax.f32 %v250, 0.0
  %v267 = vmax.f32 %v251, 0.0
  %v268 = vmax.f32 %v252, 0.0
  %v269 = vmax.f32 %v253, 0.0
  %v270 = vmax.f32 %v254, 0.0
  %v271 = vmax.f32 %v255, 0.0
  %v272 = vmax.f32 %v256, 0.0
  %v273 = vmax.f32 %v257, 0.0
  %v274 = vmax.f32 %v258, 0.0
  %v275 = vmin.f32 %v259, 1.0
  %v276 = vmin.f32 %v260, 1.0
  %v277 = vmin.f32 %v261, 1.0
  %v278 = vmin.f32 %v262, 1.0
  %v279 = vmin.f32 %v263, 1.0
  %v280 = vmin.f32 %v264, 1.0
  %v281 = vmin.f32 %v265, 1.0
  %v282 = vmin.f32 %v266, 1.0
  %v283 = vmin.f32 %v267, 1.0
  %v284 = vmin.f32 %v268, 1.0
  %v285 = vmin.f32 %v269, 1.0
  %v286 = vmin.f32 %v270, 1.0
  %v287 = vmin.f32 %v271, 1.0
  %v288 = vmin.f32 %v272, 1.0
  %v289 = vmin.f32 %v273, 1.0
  %v290 = vmin.f32 %v274, 1.0
  %v291 = vadd.f32 %v243, 1e-08
  %v292 = vadd.f32 %v244, 1e-08
  %v293 = vadd.f32 %v245, 1e-08
  %v294 = vadd.f32 %v246, 1e-08
  %v295 = vadd.f32 %v247, 1e-08
  %v296 = vadd.f32 %v248, 1e-08
  %v297 = vadd.f32 %v249, 1e-08
  %v298 = vadd.f32 %v250, 1e-08
  %v299 = vadd.f32 %v251, 1e-08
  %v300 = vadd.f32 %v252, 1e-08
  %v301 = vadd.f32 %v253, 1e-08
  %v302 = vadd.f32 %v254, 1e-08
  %v303 = vadd.f32 %v255, 1e-08
  %v304 = vadd.f32 %v256, 1e-08
  %v305 = vadd.f32 %v257, 1e-08
  %v306 = vadd.f32 %v258, 1e-08
  %v307 = vrcp.pop %v291
  %v308 = vrcp.pop %v292
  %v309 = vrcp.pop %v293
  %v310 = vrcp.pop %v294
  %v311 = vrcp.pop %v295
  %v312 = vrcp.pop %v296
  %v313 = vrcp.pop %v297
  %v314 = vrcp.pop %v298
  %v315 = vrcp.pop %v299
  %v316 = vrcp.pop %v300
  %v317 = vrcp.pop %v301
  %v318 = vrcp.pop %v302
  %v319 = vrcp.pop %v303
  %v320 = vrcp.pop %v304
  %v321 = vrcp.pop %v305
  %v322 = vrcp.pop %v306
  %v323 = vmul.f32 %v307, 9.0
  %v324 = vmul.f32 %v308, 9.0
  %v325 = vmul.f32 %v309, 9.0
  %v326 = vmul.f32 %v310, 9.0
  %v327 = vmul.f32 %v311, 9.0
  %v328 = vmul.f32 %v312, 9.0
  %v329 = vmul.f32 %v313, 9.0
  %v330 = vmul.f32 %v314, 9.0
  %v331 = vmul.f32 %v315, 9.0
  %v332 = vmul.f32 %v316, 9.0
  %v333 = vmul.f32 %v317, 9.0
  %v334 = vmul.f32 %v318, 9.0
  %v335 = vmul.f32 %v319, 9.0
  %v336 = vmul.f32 %v320, 9.0
  %v337 = vmul.f32 %v321, 9.0
  %v338 = vmul.f32 %v322, 9.0
  %v339 = vmul.f32 %v323, %v275
  %v340 = vmul.f32 %v324, %v276
  %v341 = vmul.f32 %v325, %v277
  %v342 = vmul.f32 %v326, %v278
  %v343 = vmul.f32 %v327, %v279
  %v344 = vmul.f32 %v328, %v280
  %v345 = vmul.f32 %v329, %v281
  %v346 = vmul.f32 %v330, %v282
  %v347 = vmul.f32 %v331, %v283
  %v348 = vmul.f32 %v332, %v284
  %v349 = vmul.f32 %v333, %v285
  %v350 = vmul.f32 %v334, %v286
  %v351 = vmul.f32 %v335, %v287
  %v352 = vmul.f32 %v336, %v288
  %v353 = vmul.f32 %v337, %v289
  %v354 = vmul.f32 %v338, %v290
  %356 = vset.pattern.permute.xlu0 0
  %357 = vperm.xlu0 %356, %v339
  %v358 = vpop.permute.xlu0 %357
  %361 = vset.pattern.permute.xlu0 0
  %362 = vperm.xlu0 %361, %v340
  %v363 = vpop.permute.xlu0 %362
  %366 = vset.pattern.permute.xlu0 0
  %367 = vperm.xlu0 %366, %v341
  %v368 = vpop.permute.xlu0 %367
  %371 = vset.pattern.permute.xlu0 0
  %372 = vperm.xlu0 %371, %v342
  %v373 = vpop.permute.xlu0 %372
  %376 = vset.pattern.permute.xlu0 0
  %377 = vperm.xlu0 %376, %v343
  %v378 = vpop.permute.xlu0 %377
  %381 = vset.pattern.permute.xlu0 0
  %382 = vperm.xlu0 %381, %v344
  %v383 = vpop.permute.xlu0 %382
  %386 = vset.pattern.permute.xlu0 0
  %387 = vperm.xlu0 %386, %v345
  %v388 = vpop.permute.xlu0 %387
  %391 = vset.pattern.permute.xlu0 0
  %392 = vperm.xlu0 %391, %v346
  %v393 = vpop.permute.xlu0 %392
  %396 = vset.pattern.permute.xlu0 0
  %397 = vperm.xlu0 %396, %v347
  %v398 = vpop.permute.xlu0 %397
  %401 = vset.pattern.permute.xlu0 0
  %402 = vperm.xlu0 %401, %v348
  %v403 = vpop.permute.xlu0 %402
  %406 = vset.pattern.permute.xlu0 0
  %407 = vperm.xlu0 %406, %v349
  %v408 = vpop.permute.xlu0 %407
  %411 = vset.pattern.permute.xlu0 0
  %412 = vperm.xlu0 %411, %v350
  %v413 = vpop.permute.xlu0 %412
  %416 = vset.pattern.permute.xlu0 0
  %417 = vperm.xlu0 %416, %v351
  %v418 = vpop.permute.xlu0 %417
  %421 = vset.pattern.permute.xlu0 0
  %422 = vperm.xlu0 %421, %v352
  %v423 = vpop.permute.xlu0 %422
  %426 = vset.pattern.permute.xlu0 0
  %427 = vperm.xlu0 %426, %v353
  %v428 = vpop.permute.xlu0 %427
  %431 = vset.pattern.permute.xlu0 0
  %432 = vperm.xlu0 %431, %v354
  %v433 = vpop.permute.xlu0 %432
  %v435 = vmul.f32 %v181, %v358
  %v436 = vmul.f32 %v184, %v363
  %v437 = vmul.f32 %v189, %v368
  %v438 = vmul.f32 %v192, %v373
  %v439 = vmul.f32 %v197, %v378
  %v440 = vmul.f32 %v200, %v383
  %v441 = vmul.f32 %v205, %v388
  %v442 = vmul.f32 %v208, %v393
  %v443 = vmul.f32 %v213, %v398
  %v444 = vmul.f32 %v216, %v403
  %v445 = vmul.f32 %v221, %v408
  %v446 = vmul.f32 %v224, %v413
  %v447 = vmul.f32 %v229, %v418
  %v448 = vmul.f32 %v232, %v423
  %v449 = vmul.f32 %v237, %v428
  %v450 = vmul.f32 %v240, %v433
  %v451 = vmax.f32 %v435, 0.0
  %v452 = vmax.f32 %v436, 0.0
  %v453 = vmax.f32 %v437, 0.0
  %v454 = vmax.f32 %v438, 0.0
  %v455 = vmax.f32 %v439, 0.0
  %v456 = vmax.f32 %v440, 0.0
  %v457 = vmax.f32 %v441, 0.0
  %v458 = vmax.f32 %v442, 0.0
  %v459 = vmax.f32 %v443, 0.0
  %v460 = vmax.f32 %v444, 0.0
  %v461 = vmax.f32 %v445, 0.0
  %v462 = vmax.f32 %v446, 0.0
  %v463 = vmax.f32 %v447, 0.0
  %v464 = vmax.f32 %v448, 0.0
  %v465 = vmax.f32 %v449, 0.0
  %v466 = vmax.f32 %v450, 0.0
  %467 = vst [vmem:[%s4] sm:$0xff] %v451
  %468 = vst [vmem:[%s4 + $0x8] sm:$0xff] %v452
  %469 = vst [vmem:[%s4 + $0x10] sm:$0xff] %v453
  %470 = vst [vmem:[%s4 + $0x18] sm:$0xff] %v454
  %471 = vst [vmem:[%s4 + $0x20] sm:$0xff] %v455
  %472 = vst [vmem:[%s4 + $0x28] sm:$0xff] %v456
  %473 = vst [vmem:[%s4 + $0x30] sm:$0xff] %v457
  %474 = vst [vmem:[%s4 + $0x38] sm:$0xff] %v458
  %475 = vst [vmem:[%s4 + $0x40] sm:$0xff] %v459
  %476 = vst [vmem:[%s4 + $0x48] sm:$0xff] %v460
  %477 = vst [vmem:[%s4 + $0x50] sm:$0xff] %v461
  %478 = vst [vmem:[%s4 + $0x58] sm:$0xff] %v462
  %479 = vst [vmem:[%s4 + $0x60] sm:$0xff] %v463
  %480 = vst [vmem:[%s4 + $0x68] sm:$0xff] %v464
  %481 = vst [vmem:[%s4 + $0x70] sm:$0xff] %v465
  %482 = vst [vmem:[%s4 + $0x78] sm:$0xff] %v466
  // Predicated region
  $region18: #{encoder_layer.3} parent=0 // pred_check
    _
  $region19: #{encoder_layer.3} parent=0 // pred_check_branch
    %484 = sbr.rel (0) target = $region21
  $region20: #{encoder_layer.3} parent=0 // pred_region
    _
  $region21: #{encoder_layer.3} parent=0 // pred_fallthru
    _
  // Predicated region
  $region22: #{encoder_layer.3} parent=0 // pred_check
    _
  $region23: #{encoder_layer.3} parent=0 // pred_check_branch
    %486 = sbr.rel (0) target = $region25
  $region24: #{encoder_layer.3} parent=0 // pred_region
    _
  $region25: #{encoder_layer.3} parent=0 // pred_fallthru
    _

</llo_original>
